<compile_context>
chip_gen: v7x
topology: tpu7x:2x2x1
jax: 0.10.0
libtpu: 0.0.40
codegen_flags: <defaults>
</compile_context>

<pallas_src>
import functools
import math

import jax
import jax.numpy as jnp
from jax.experimental import pallas as pl
from jax.experimental.pallas import tpu as pltpu


# ---------------------------------------------------------------------------
# helpers
# ---------------------------------------------------------------------------

def _pick_tile(dim, target, aligns):
    """Largest divisor of `dim` that is <= target and a multiple of one of
    `aligns` (earlier entries preferred).  Falls back to the full dim."""
    if dim <= target:
        return dim
    for align in aligns:
        t = (target // align) * align
        while t >= align:
            if dim % t == 0:
                return t
            t -= align
    # TODO(synk): use a cdiv grid with masked tails for prime/indivisible dims
    # instead of a (potentially VMEM-busting) full-extent block.
    return dim


@functools.lru_cache(maxsize=None)
def _vmem_limit_bytes():
    """Per-generation scoped-VMEM limit with headroom (v7x physical = 64 MiB)."""
    try:
        cap = pltpu.get_tpu_info().vmem_capacity_bytes
    except Exception:
        cap = 64 * 1024 * 1024
    return int(cap * 0.8)


# ---------------------------------------------------------------------------
# fused qkv linear: tiled matmul + bias, output split as (3, M, C)
# ---------------------------------------------------------------------------

def _linear_qkv_kernel(x_ref, w_ref, b_ref, o_ref, acc_ref):
    """One (tm, tn) tile of one of q/k/v; K-reduction over grid axis 3."""
    k = pl.program_id(3)

    @pl.when(k == 0)
    def _init():
        acc_ref[...] = jnp.zeros_like(acc_ref)

    acc_ref[...] += jnp.dot(x_ref[...], w_ref[0],
                            preferred_element_type=jnp.float32)

    @pl.when(k == pl.num_programs(3) - 1)
    def _finalize():
        o_ref[0] = (acc_ref[...] + b_ref[0]).astype(o_ref.dtype)


def pallas_qkv_linear(x2d, w, b, *, out_dtype=jnp.bfloat16,
                      tm_target=512, tn_target=512, tk_target=1024):
    """(M, K) @ (K, 3C) + b  ->  (3, M, C).  bf16 MXU inputs, f32 accumulation."""
    m, kdim = x2d.shape
    n = w.shape[1]
    c = n // 3

    tm = _pick_tile(m, tm_target, (16, 8))
    tn = _pick_tile(c, tn_target, (256, 128))
    tk = _pick_tile(kdim, tk_target, (256, 128))

    x_bf = x2d.astype(jnp.bfloat16)
    # (K, 3C) -> (3, K, C): q/k/v selectable via the leading grid axis, and the
    # BlockSpec last-dim stays within one C-wide slab (128-friendly for any C).
    w3 = w.reshape(kdim, 3, c).transpose(1, 0, 2).astype(jnp.bfloat16)
    b3 = b.reshape(3, 1, c).astype(jnp.float32)

    grid = (3, m // tm, c // tn, kdim // tk)

    flops = 2 * m * n * kdim
    bytes_accessed = ((n // tn) * m * kdim * 2          # x re-read per (s, j)
                      + (m // tm) * kdim * n * 2        # w re-read per i
                      + m * n * jnp.dtype(out_dtype).itemsize)

    return pl.pallas_call(
        _linear_qkv_kernel,
        out_shape=jax.ShapeDtypeStruct((3, m, c), out_dtype),
        grid_spec=pltpu.PrefetchScalarGridSpec(
            num_scalar_prefetch=0,
            grid=grid,
            in_specs=[
                pl.BlockSpec((tm, tk), lambda s, i, j, k: (i, k)),
                pl.BlockSpec((1, tk, tn), lambda s, i, j, k: (s, k, j)),
                pl.BlockSpec((1, 1, tn), lambda s, i, j, k: (s, 0, j)),
            ],
            out_specs=pl.BlockSpec((1, tm, tn), lambda s, i, j, k: (s, i, j)),
            scratch_shapes=[pltpu.VMEM((tm, tn), jnp.float32)],
        ),
        compiler_params=pltpu.CompilerParams(
            dimension_semantics=("parallel", "parallel", "parallel", "arbitrary"),
            vmem_limit_bytes=_vmem_limit_bytes(),
        ),
        cost_estimate=pl.CostEstimate(
            flops=flops, transcendentals=0, bytes_accessed=bytes_accessed),
    )(x_bf, w3, b3)


# ---------------------------------------------------------------------------
# plain linear (c_proj): tiled matmul + bias
# ---------------------------------------------------------------------------

def _linear_kernel(x_ref, w_ref, b_ref, o_ref, acc_ref):
    k = pl.program_id(2)

    @pl.when(k == 0)
    def _init():
        acc_ref[...] = jnp.zeros_like(acc_ref)

    acc_ref[...] += jnp.dot(x_ref[...], w_ref[...],
                            preferred_element_type=jnp.float32)

    @pl.when(k == pl.num_programs(2) - 1)
    def _finalize():
        o_ref[...] = (acc_ref[...] + b_ref[...]).astype(o_ref.dtype)


def pallas_linear(x2d, w, b, *, out_dtype=jnp.float32,
                  tm_target=512, tn_target=512, tk_target=1024):
    """(M, K) @ (K, N) + b  ->  (M, N).  bf16 MXU inputs, f32 accumulation."""
    m, kdim = x2d.shape
    n = w.shape[1]

    tm = _pick_tile(m, tm_target, (16, 8))
    tn = _pick_tile(n, tn_target, (256, 128))
    tk = _pick_tile(kdim, tk_target, (256, 128))

    x_bf = x2d.astype(jnp.bfloat16)
    w_bf = w.astype(jnp.bfloat16)
    b2d = b.reshape(1, n).astype(jnp.float32)

    grid = (m // tm, n // tn, kdim // tk)

    flops = 2 * m * n * kdim
    bytes_accessed = ((n // tn) * m * kdim * 2
                      + (m // tm) * kdim * n * 2
                      + m * n * jnp.dtype(out_dtype).itemsize)

    return pl.pallas_call(
        _linear_kernel,
        out_shape=jax.ShapeDtypeStruct((m, n), out_dtype),
        grid_spec=pltpu.PrefetchScalarGridSpec(
            num_scalar_prefetch=0,
            grid=grid,
            in_specs=[
                pl.BlockSpec((tm, tk), lambda i, j, k: (i, k)),
                pl.BlockSpec((tk, tn), lambda i, j, k: (k, j)),
                pl.BlockSpec((1, tn), lambda i, j, k: (0, j)),
            ],
            out_specs=pl.BlockSpec((tm, tn), lambda i, j, k: (i, j)),
            scratch_shapes=[pltpu.VMEM((tm, tn), jnp.float32)],
        ),
        compiler_params=pltpu.CompilerParams(
            dimension_semantics=("parallel", "parallel", "arbitrary"),
            vmem_limit_bytes=_vmem_limit_bytes(),
        ),
        cost_estimate=pl.CostEstimate(
            flops=flops, transcendentals=0, bytes_accessed=bytes_accessed),
    )(x_bf, w_bf, b2d)


# ---------------------------------------------------------------------------
# attention: flash-style online softmax over KV tiles, head-batched matmuls
# ---------------------------------------------------------------------------

def _mha_attn_kernel(q_ref, k_ref, v_ref, o_ref, q_hbd, m_sc, l_sc, acc_sc,
                     *, n_head, head_dim):
    # q_ref : (1, 1, tq,  C) bf16  -- q rows (pre-scaled), resident over kv axis
    # k_ref : (1, 1, tkv, C) bf16  -- streamed K block (only K columns fetched)
    # v_ref : (1, 1, tkv, C) bf16  -- streamed V block
    # o_ref : (1, tq, C)           -- lane-dense output slab
    # q_hbd : (H, tq, D) bf16      -- head-major staged q (filled at kv_i == 0)
    # m_sc/l_sc : (H, tq, 1) f32   -- running max / denominator
    # acc_sc    : (H, tq, D) f32   -- running numerator
    kv_i = pl.program_id(2)

    @pl.when(kv_i == 0)
    def _init():
        m_sc[...] = jnp.full_like(m_sc, -jnp.inf)
        l_sc[...] = jnp.zeros_like(l_sc)
        acc_sc[...] = jnp.zeros_like(acc_sc)
        q_slab = q_ref[0, 0]                                  # (tq, C)
        for h in range(n_head):                               # once per q tile
            q_hbd[h] = q_slab[:, h * head_dim:(h + 1) * head_dim]

    k_slab = k_ref[0, 0]                                      # (tkv, C)
    v_slab = v_ref[0, 0]                                      # (tkv, C)
    # Head-major views, built once per KV block (not per head per matmul).
    k_hm = jnp.stack(
        [k_slab[:, h * head_dim:(h + 1) * head_dim] for h in range(n_head)], axis=0)
    v_hm = jnp.stack(
        [v_slab[:, h * head_dim:(h + 1) * head_dim] for h in range(n_head)], axis=0)

    # Head-batched scores: (H, tq, tkv) f32.  Scale is pre-folded into q.
    s = jnp.einsum("hqd,hkd->hqk", q_hbd[...], k_hm,
                   preferred_element_type=jnp.float32)

    m_prev = m_sc[...]                                        # (H, tq, 1)
    m_new = jnp.maximum(m_prev, jnp.max(s, axis=-1, keepdims=True))
    alpha = jnp.exp(m_prev - m_new)
    p = jnp.exp(s - m_new)                                    # f32 softmax math
    l_sc[...] = alpha * l_sc[...] + jnp.sum(p, axis=-1, keepdims=True)
    acc_sc[...] = alpha * acc_sc[...] + jnp.einsum(
        "hqk,hkd->hqd", p.astype(jnp.bfloat16), v_hm,
        preferred_element_type=jnp.float32)
    m_sc[...] = m_new

    @pl.when(kv_i == pl.num_programs(2) - 1)
    def _finalize():
        inv_l = pl.reciprocal(l_sc[...], approx=True)         # EUP, ~free
        y = acc_sc[...] * inv_l                               # (H, tq, D) f32
        # Merge heads back to lanes -> single lane-dense (tq, C) store.
        o_ref[0] = jnp.concatenate(
            [y[h] for h in range(n_head)], axis=-1).astype(o_ref.dtype)


def pallas_attention_from_qkv(qkv, n_head, *, tq_target=128, tkv_target=512):
    """qkv: (3, B, T, C) bf16 (q pre-scaled) -> y: (B, T, C) bf16."""
    _, B, T, C = qkv.shape
    D = C // n_head

    tq = _pick_tile(T, tq_target, (16, 8))
    tkv = _pick_tile(T, tkv_target, (16, 8))
    grid = (B, T // tq, T // tkv)

    kernel = functools.partial(_mha_attn_kernel, n_head=n_head, head_dim=D)

    flops = 4 * B * n_head * T * T * D
    # q read once per (b, qi); k and v each re-streamed (T // tq) times; y written once.
    bytes_accessed = (B * T * C * 2
                      + 2 * (T // tq) * B * T * C * 2
                      + B * T * C * 2)

    return pl.pallas_call(
        kernel,
        out_shape=jax.ShapeDtypeStruct((B, T, C), jnp.bfloat16),
        grid_spec=pltpu.PrefetchScalarGridSpec(
            num_scalar_prefetch=0,
            grid=grid,
            in_specs=[
                # q rows: only the q slab, resident across the kv axis
                pl.BlockSpec((1, 1, tq, C), lambda b, qi, ki: (0, b, qi, 0)),
                # k / v rows: streamed along the kv axis (no unused q columns)
                pl.BlockSpec((1, 1, tkv, C), lambda b, qi, ki: (1, b, ki, 0)),
                pl.BlockSpec((1, 1, tkv, C), lambda b, qi, ki: (2, b, ki, 0)),
            ],
            out_specs=pl.BlockSpec((1, tq, C), lambda b, qi, ki: (b, qi, 0)),
            scratch_shapes=[
                pltpu.VMEM((n_head, tq, D), jnp.bfloat16),   # staged head-major q
                pltpu.VMEM((n_head, tq, 1), jnp.float32),    # running max
                pltpu.VMEM((n_head, tq, 1), jnp.float32),    # running denominator
                pltpu.VMEM((n_head, tq, D), jnp.float32),    # running numerator
            ],
        ),
        compiler_params=pltpu.CompilerParams(
            dimension_semantics=("parallel", "parallel", "arbitrary"),
            vmem_limit_bytes=_vmem_limit_bytes(),
        ),
        cost_estimate=pl.CostEstimate(
            flops=flops,
            transcendentals=2 * B * n_head * T * T,
            bytes_accessed=bytes_accessed),
    )(qkv, qkv, qkv)


# ---------------------------------------------------------------------------
# MultiHeadAttention forward (Pallas-backed)
# ---------------------------------------------------------------------------

def multi_head_attention(x, params, n_head):
    """x: (B, T, C) f32. params: dict of c_attn / c_proj weights & biases (f32)."""
    B, T, C = x.shape
    D = C // n_head
    scale = 1.0 / math.sqrt(D)

    # Fold the 1/sqrt(D) attention scale into the q columns of c_attn (f32,
    # one-time on the small weight) so the attention kernel does no scaling.
    w_attn = params["w_attn"].at[:, :C].multiply(scale)
    b_attn = params["b_attn"].at[:C].multiply(scale)

    # fused qkv projection -> slab-split (3, B, T, C) bf16
    qkv = pallas_qkv_linear(x.reshape(B * T, C), w_attn, b_attn,
                            out_dtype=jnp.bfloat16)
    qkv = qkv.reshape(3, B, T, C)

    # flash attention straight from the split slab
    y = pallas_attention_from_qkv(qkv, n_head)               # (B, T, C) bf16

    # output projection back to f32
    out = pallas_linear(y.reshape(B * T, C), params["w_proj"], params["b_proj"],
                        out_dtype=jnp.float32)
    return out.reshape(B, T, C)


# pure-JAX f32 reference for the correctness check
def multi_head_attention_ref(x, params, n_head):
    B, T, C = x.shape
    D = C // n_head
    qkv = x.reshape(B * T, C) @ params["w_attn"] + params["b_attn"]
    qkv = qkv.reshape(B, T, 3 * C)
    q, k, v = jnp.split(qkv, 3, axis=2)
    q = q.reshape(B, T, n_head, D).transpose(0, 2, 1, 3)
    k = k.reshape(B, T, n_head, D).transpose(0, 2, 1, 3)
    v = v.reshape(B, T, n_head, D).transpose(0, 2, 1, 3)
    att = jnp.einsum("bhqd,bhkd->bhqk", q, k) / math.sqrt(D)
    att = jax.nn.softmax(att, axis=-1)
    y = jnp.einsum("bhqk,bhkd->bhqd", att, v)
    y = y.transpose(0, 2, 1, 3).reshape(B, T, C)
    return (y.reshape(B * T, C) @ params["w_proj"] + params["b_proj"]).reshape(B, T, C)


# ---------------------------------------------------------------------------
# Main
# ---------------------------------------------------------------------------

if __name__ == "__main__":
    # config: n_embd=32, n_head=4, dropout=0.0;  B=2, T=8
    B, T, C, H = 2, 8, 32, 4

    key = jax.random.PRNGKey(0)
    k_x, k_wa, k_ba, k_wp, k_bp = jax.random.split(key, 5)

    x = jax.random.normal(k_x, (B, T, C), dtype=jnp.float32)

    # nn.Linear params stored pre-transposed as (in_features, out_features).
    params = {
        "w_attn": jax.random.normal(k_wa, (C, 3 * C), dtype=jnp.float32) * 0.02,
        "b_attn": jax.random.normal(k_ba, (3 * C,), dtype=jnp.float32) * 0.02,
        "w_proj": jax.random.normal(k_wp, (C, C), dtype=jnp.float32) * 0.02,
        "b_proj": jax.random.normal(k_bp, (C,), dtype=jnp.float32) * 0.02,
    }

    fwd = jax.jit(multi_head_attention, static_argnums=2)
    out = jax.block_until_ready(fwd(x, params, H))

    ref = multi_head_attention_ref(x, params, H)
    assert out.shape == (B, T, C)
    max_err = jnp.max(jnp.abs(out - ref))
    # bf16 MXU inputs + approx reciprocal -> relaxed tolerance vs the f32 reference
    assert jnp.allclose(out, ref, atol=3e-2, rtol=3e-2), (
        f"mismatch vs reference (max abs err {max_err})")

    print("KERNEL_OK")
</pallas_src>

<mosaic_0001>
module attributes {stable_mosaic.version = 11 : i64} {
  func.func @_linear_qkv_kernel(%arg0: i32, %arg1: i32, %arg2: i32, %arg3: i32, %arg4: memref<16x32xbf16, #tpu.memory_space<vmem>>, %arg5: memref<1x32x32xbf16, #tpu.memory_space<vmem>>, %arg6: memref<1x1x32xf32, #tpu.memory_space<vmem>>, %arg7: memref<1x16x32xbf16, #tpu.memory_space<vmem>>, %arg8: memref<16x32xf32, #tpu.memory_space<vmem>>) attributes {dimension_semantics = [#tpu.dimension_semantics<parallel>, #tpu.dimension_semantics<parallel>, #tpu.dimension_semantics<parallel>, #tpu.dimension_semantics<arbitrary>], iteration_bounds = array<i64: 3, 1, 1, 1>, scalar_prefetch = 0 : i64, scratch_operands = 1 : i64, tpu.core_type = #tpu.core_type<tc>, window_params = [{transform_indices = @transform_0, window_bounds = array<i64: 16, 32>}, {transform_indices = @transform_1, window_bounds = array<i64: 1, 32, 32>}, {transform_indices = @transform_2, window_bounds = array<i64: 1, 1, 32>}, {transform_indices = @transform_3, window_bounds = array<i64: 1, 16, 32>}]} {
    %c0_i32 = arith.constant 0 : i32
    %0 = arith.cmpi eq, %arg3, %c0_i32 : i32
    %1 = arith.extui %0 : i1 to i32
    %c0_i32_0 = arith.constant 0 : i32
    %2 = arith.cmpi ne, %1, %c0_i32_0 : i32
    scf.if %2 {
      %cst_11 = arith.constant 0.000000e+00 : f32
      %13 = vector.broadcast %cst_11 : f32 to vector<16x32xf32>
      %c0_12 = arith.constant 0 : index
      %c0_13 = arith.constant 0 : index
      %14 = vector.load %arg8[%c0_12, %c0_13] : memref<16x32xf32, #tpu.memory_space<vmem>>, vector<16x32xf32>
      tpu.vector_store %arg8[%c0_12, %c0_13], %13 {strides = array<i32>} : memref<16x32xf32, #tpu.memory_space<vmem>>, vector<16x32xf32>,
    } else {
    }
    %c0 = arith.constant 0 : index
    %c0_1 = arith.constant 0 : index
    %3 = vector.load %arg8[%c0, %c0_1] : memref<16x32xf32, #tpu.memory_space<vmem>>, vector<16x32xf32>
    %c0_2 = arith.constant 0 : index
    %c0_3 = arith.constant 0 : index
    %4 = vector.load %arg4[%c0_2, %c0_3] : memref<16x32xbf16, #tpu.memory_space<vmem>>, vector<16x32xbf16>
    %c0_4 = arith.constant 0 : index
    %c0_5 = arith.constant 0 : index
    %c0_6 = arith.constant 0 : index
    %5 = vector.load %arg5[%c0_4, %c0_5, %c0_6] : memref<1x32x32xbf16, #tpu.memory_space<vmem>>, vector<1x32x32xbf16>
    %6 = vector.shape_cast %5 : vector<1x32x32xbf16> to vector<32x32xbf16>
    %cst = arith.constant dense<0.000000e+00> : vector<16x32xf32>
    %7 = tpu.matmul %4, %6, %cst {dimension_numbers = #tpu.dot_dimension_numbers<[1], [0], [0], [1], [0, 0, 1, 1], [], []>} : vector<16x32xbf16>, vector<32x32xbf16>, vector<16x32xf32> -> vector<16x32xf32>
    %8 = arith.addf %3, %7 : vector<16x32xf32>
    %c0_7 = arith.constant 0 : index
    %c0_8 = arith.constant 0 : index
    %9 = vector.load %arg8[%c0_7, %c0_8] : memref<16x32xf32, #tpu.memory_space<vmem>>, vector<16x32xf32>
    tpu.vector_store %arg8[%c0_7, %c0_8], %8 {strides = array<i32>} : memref<16x32xf32, #tpu.memory_space<vmem>>, vector<16x32xf32>,
    %c0_i32_9 = arith.constant 0 : i32
    %10 = arith.cmpi eq, %arg3, %c0_i32_9 : i32
    %11 = arith.extui %10 : i1 to i32
    %c0_i32_10 = arith.constant 0 : i32
    %12 = arith.cmpi ne, %11, %c0_i32_10 : i32
    scf.if %12 {
      %c0_11 = arith.constant 0 : index
      %c0_12 = arith.constant 0 : index
      %13 = vector.load %arg8[%c0_11, %c0_12] : memref<16x32xf32, #tpu.memory_space<vmem>>, vector<16x32xf32>
      %c0_13 = arith.constant 0 : index
      %c0_14 = arith.constant 0 : index
      %c0_15 = arith.constant 0 : index
      %14 = vector.load %arg6[%c0_13, %c0_14, %c0_15] : memref<1x1x32xf32, #tpu.memory_space<vmem>>, vector<1x1x32xf32>
      %15 = vector.shape_cast %14 : vector<1x1x32xf32> to vector<1x32xf32>
      %16 = vector.broadcast %15 : vector<1x32xf32> to vector<16x32xf32>
      %17 = arith.addf %13, %16 : vector<16x32xf32>
      %18 = arith.truncf %17 : vector<16x32xf32> to vector<16x32xbf16>
      %c0_16 = arith.constant 0 : index
      %c0_17 = arith.constant 0 : index
      %c0_18 = arith.constant 0 : index
      %19 = vector.load %arg7[%c0_16, %c0_17, %c0_18] : memref<1x16x32xbf16, #tpu.memory_space<vmem>>, vector<1x16x32xbf16>
      %20 = vector.shape_cast %19 : vector<1x16x32xbf16> to vector<16x32xbf16>
      %21 = vector.shape_cast %18 : vector<16x32xbf16> to vector<1x16x32xbf16>
      tpu.vector_store %arg7[%c0_16, %c0_17, %c0_18], %21 {strides = array<i32>} : memref<1x16x32xbf16, #tpu.memory_space<vmem>>, vector<1x16x32xbf16>,
    } else {
    }
    return
  }
  func.func @transform_0(%arg0: i32, %arg1: i32, %arg2: i32, %arg3: i32) -> (i32, i32) {
    %c0_i32 = arith.constant 0 : i32
    return %arg1, %arg3 : i32, i32
  }
  func.func @transform_1(%arg0: i32, %arg1: i32, %arg2: i32, %arg3: i32) -> (i32, i32, i32) {
    %c0_i32 = arith.constant 0 : i32
    return %arg0, %arg3, %arg2 : i32, i32, i32
  }
  func.func @transform_2(%arg0: i32, %arg1: i32, %arg2: i32, %arg3: i32) -> (i32, i32, i32) {
    %c0_i32 = arith.constant 0 : i32
    %c0_i32_0 = arith.constant 0 : i32
    return %arg0, %c0_i32, %arg2 : i32, i32, i32
  }
  func.func @transform_3(%arg0: i32, %arg1: i32, %arg2: i32, %arg3: i32) -> (i32, i32, i32) {
    %c0_i32 = arith.constant 0 : i32
    return %arg0, %arg1, %arg2 : i32, i32, i32
  }
}

module attributes {stable_mosaic.version = 11 : i64} {
  func.func @_mha_attn_kernel(%arg0: i32, %arg1: i32, %arg2: i32, %arg3: memref<1x1x8x32xbf16, #tpu.memory_space<vmem>>, %arg4: memref<1x1x8x32xbf16, #tpu.memory_space<vmem>>, %arg5: memref<1x1x8x32xbf16, #tpu.memory_space<vmem>>, %arg6: memref<1x8x32xbf16, #tpu.memory_space<vmem>>, %arg7: memref<4x8x8xbf16, #tpu.memory_space<vmem>>, %arg8: memref<4x8x1xf32, #tpu.memory_space<vmem>>, %arg9: memref<4x8x1xf32, #tpu.memory_space<vmem>>, %arg10: memref<4x8x8xf32, #tpu.memory_space<vmem>>) attributes {dimension_semantics = [#tpu.dimension_semantics<parallel>, #tpu.dimension_semantics<parallel>, #tpu.dimension_semantics<arbitrary>], iteration_bounds = array<i64: 2, 1, 1>, scalar_prefetch = 0 : i64, scratch_operands = 4 : i64, tpu.core_type = #tpu.core_type<tc>, window_params = [{transform_indices = @transform_0, window_bounds = array<i64: 1, 1, 8, 32>}, {transform_indices = @transform_1, window_bounds = array<i64: 1, 1, 8, 32>}, {transform_indices = @transform_2, window_bounds = array<i64: 1, 1, 8, 32>}, {transform_indices = @transform_3, window_bounds = array<i64: 1, 8, 32>}]} {
    %c0_i32 = arith.constant 0 : i32
    %0 = arith.cmpi eq, %arg2, %c0_i32 : i32
    %1 = arith.extui %0 : i1 to i32
    %c0_i32_0 = arith.constant 0 : i32
    %2 = arith.cmpi ne, %1, %c0_i32_0 : i32
    scf.if %2 {
      %cst_34 = arith.constant 0xFF800000 : f32
      %53 = vector.broadcast %cst_34 : f32 to vector<4x8x1xf32>
      %c0_35 = arith.constant 0 : index
      %c0_36 = arith.constant 0 : index
      %c0_37 = arith.constant 0 : index
      %54 = vector.load %arg8[%c0_35, %c0_36, %c0_37] : memref<4x8x1xf32, #tpu.memory_space<vmem>>, vector<4x8x1xf32>
      tpu.vector_store %arg8[%c0_35, %c0_36, %c0_37], %53 {strides = array<i32>} : memref<4x8x1xf32, #tpu.memory_space<vmem>>, vector<4x8x1xf32>,
      %cst_38 = arith.constant 0.000000e+00 : f32
      %55 = vector.broadcast %cst_38 : f32 to vector<4x8x1xf32>
      %c0_39 = arith.constant 0 : index
      %c0_40 = arith.constant 0 : index
      %c0_41 = arith.constant 0 : index
      %56 = vector.load %arg9[%c0_39, %c0_40, %c0_41] : memref<4x8x1xf32, #tpu.memory_space<vmem>>, vector<4x8x1xf32>
      tpu.vector_store %arg9[%c0_39, %c0_40, %c0_41], %55 {strides = array<i32>} : memref<4x8x1xf32, #tpu.memory_space<vmem>>, vector<4x8x1xf32>,
      %cst_42 = arith.constant 0.000000e+00 : f32
      %57 = vector.broadcast %cst_42 : f32 to vector<4x8x8xf32>
      %c0_43 = arith.constant 0 : index
      %c0_44 = arith.constant 0 : index
      %c0_45 = arith.constant 0 : index
      %58 = vector.load %arg10[%c0_43, %c0_44, %c0_45] : memref<4x8x8xf32, #tpu.memory_space<vmem>>, vector<4x8x8xf32>
      tpu.vector_store %arg10[%c0_43, %c0_44, %c0_45], %57 {strides = array<i32>} : memref<4x8x8xf32, #tpu.memory_space<vmem>>, vector<4x8x8xf32>,
      %c0_46 = arith.constant 0 : index
      %c0_47 = arith.constant 0 : index
      %c0_48 = arith.constant 0 : index
      %c0_49 = arith.constant 0 : index
      %59 = vector.load %arg3[%c0_46, %c0_47, %c0_48, %c0_49] : memref<1x1x8x32xbf16, #tpu.memory_space<vmem>>, vector<1x1x8x32xbf16>
      %60 = vector.shape_cast %59 : vector<1x1x8x32xbf16> to vector<8x32xbf16>
      %61 = vector.extract_strided_slice %60 {offsets = [0, 0], sizes = [8, 8], strides = [1, 1]} : vector<8x32xbf16> to vector<8x8xbf16>
      %c0_50 = arith.constant 0 : index
      %c0_51 = arith.constant 0 : index
      %c0_52 = arith.constant 0 : index
      %62 = vector.load %arg7[%c0_50, %c0_51, %c0_52] : memref<4x8x8xbf16, #tpu.memory_space<vmem>>, vector<1x8x8xbf16>
      %63 = vector.shape_cast %62 : vector<1x8x8xbf16> to vector<8x8xbf16>
      %64 = vector.shape_cast %61 : vector<8x8xbf16> to vector<1x8x8xbf16>
      tpu.vector_store %arg7[%c0_50, %c0_51, %c0_52], %64 {strides = array<i32>} : memref<4x8x8xbf16, #tpu.memory_space<vmem>>, vector<1x8x8xbf16>,
      %65 = vector.extract_strided_slice %60 {offsets = [0, 8], sizes = [8, 8], strides = [1, 1]} : vector<8x32xbf16> to vector<8x8xbf16>
      %c1 = arith.constant 1 : index
      %c0_53 = arith.constant 0 : index
      %c0_54 = arith.constant 0 : index
      %66 = vector.load %arg7[%c1, %c0_53, %c0_54] : memref<4x8x8xbf16, #tpu.memory_space<vmem>>, vector<1x8x8xbf16>
      %67 = vector.shape_cast %66 : vector<1x8x8xbf16> to vector<8x8xbf16>
      %68 = vector.shape_cast %65 : vector<8x8xbf16> to vector<1x8x8xbf16>
      tpu.vector_store %arg7[%c1, %c0_53, %c0_54], %68 {strides = array<i32>} : memref<4x8x8xbf16, #tpu.memory_space<vmem>>, vector<1x8x8xbf16>,
      %69 = vector.extract_strided_slice %60 {offsets = [0, 16], sizes = [8, 8], strides = [1, 1]} : vector<8x32xbf16> to vector<8x8xbf16>
      %c2 = arith.constant 2 : index
      %c0_55 = arith.constant 0 : index
      %c0_56 = arith.constant 0 : index
      %70 = vector.load %arg7[%c2, %c0_55, %c0_56] : memref<4x8x8xbf16, #tpu.memory_space<vmem>>, vector<1x8x8xbf16>
      %71 = vector.shape_cast %70 : vector<1x8x8xbf16> to vector<8x8xbf16>
      %72 = vector.shape_cast %69 : vector<8x8xbf16> to vector<1x8x8xbf16>
      tpu.vector_store %arg7[%c2, %c0_55, %c0_56], %72 {strides = array<i32>} : memref<4x8x8xbf16, #tpu.memory_space<vmem>>, vector<1x8x8xbf16>,
      %73 = vector.extract_strided_slice %60 {offsets = [0, 24], sizes = [8, 8], strides = [1, 1]} : vector<8x32xbf16> to vector<8x8xbf16>
      %c3 = arith.constant 3 : index
      %c0_57 = arith.constant 0 : index
      %c0_58 = arith.constant 0 : index
      %74 = vector.load %arg7[%c3, %c0_57, %c0_58] : memref<4x8x8xbf16, #tpu.memory_space<vmem>>, vector<1x8x8xbf16>
      %75 = vector.shape_cast %74 : vector<1x8x8xbf16> to vector<8x8xbf16>
      %76 = vector.shape_cast %73 : vector<8x8xbf16> to vector<1x8x8xbf16>
      tpu.vector_store %arg7[%c3, %c0_57, %c0_58], %76 {strides = array<i32>} : memref<4x8x8xbf16, #tpu.memory_space<vmem>>, vector<1x8x8xbf16>,
    } else {
    }
    %c0 = arith.constant 0 : index
    %c0_1 = arith.constant 0 : index
    %c0_2 = arith.constant 0 : index
    %c0_3 = arith.constant 0 : index
    %3 = vector.load %arg4[%c0, %c0_1, %c0_2, %c0_3] : memref<1x1x8x32xbf16, #tpu.memory_space<vmem>>, vector<1x1x8x32xbf16>
    %4 = vector.shape_cast %3 : vector<1x1x8x32xbf16> to vector<8x32xbf16>
    %c0_4 = arith.constant 0 : index
    %c0_5 = arith.constant 0 : index
    %c0_6 = arith.constant 0 : index
    %c0_7 = arith.constant 0 : index
    %5 = vector.load %arg5[%c0_4, %c0_5, %c0_6, %c0_7] : memref<1x1x8x32xbf16, #tpu.memory_space<vmem>>, vector<1x1x8x32xbf16>
    %6 = vector.shape_cast %5 : vector<1x1x8x32xbf16> to vector<8x32xbf16>
    %7 = vector.extract_strided_slice %4 {offsets = [0, 0], sizes = [8, 8], strides = [1, 1]} : vector<8x32xbf16> to vector<8x8xbf16>
    %8 = vector.extract_strided_slice %4 {offsets = [0, 8], sizes = [8, 8], strides = [1, 1]} : vector<8x32xbf16> to vector<8x8xbf16>
    %9 = vector.extract_strided_slice %4 {offsets = [0, 16], sizes = [8, 8], strides = [1, 1]} : vector<8x32xbf16> to vector<8x8xbf16>
    %10 = vector.extract_strided_slice %4 {offsets = [0, 24], sizes = [8, 8], strides = [1, 1]} : vector<8x32xbf16> to vector<8x8xbf16>
    %11 = vector.shape_cast %7 : vector<8x8xbf16> to vector<1x8x8xbf16>
    %12 = vector.shape_cast %8 : vector<8x8xbf16> to vector<1x8x8xbf16>
    %13 = vector.shape_cast %9 : vector<8x8xbf16> to vector<1x8x8xbf16>
    %14 = vector.shape_cast %10 : vector<8x8xbf16> to vector<1x8x8xbf16>
    %15 = tpu.concatenate %11, %12, %13, %14 in 0 : vector<1x8x8xbf16>, vector<1x8x8xbf16>, vector<1x8x8xbf16>, vector<1x8x8xbf16> -> vector<4x8x8xbf16>
    %16 = vector.extract_strided_slice %6 {offsets = [0, 0], sizes = [8, 8], strides = [1, 1]} : vector<8x32xbf16> to vector<8x8xbf16>
    %17 = vector.extract_strided_slice %6 {offsets = [0, 8], sizes = [8, 8], strides = [1, 1]} : vector<8x32xbf16> to vector<8x8xbf16>
    %18 = vector.extract_strided_slice %6 {offsets = [0, 16], sizes = [8, 8], strides = [1, 1]} : vector<8x32xbf16> to vector<8x8xbf16>
    %19 = vector.extract_strided_slice %6 {offsets = [0, 24], sizes = [8, 8], strides = [1, 1]} : vector<8x32xbf16> to vector<8x8xbf16>
    %20 = vector.shape_cast %16 : vector<8x8xbf16> to vector<1x8x8xbf16>
    %21 = vector.shape_cast %17 : vector<8x8xbf16> to vector<1x8x8xbf16>
    %22 = vector.shape_cast %18 : vector<8x8xbf16> to vector<1x8x8xbf16>
    %23 = vector.shape_cast %19 : vector<8x8xbf16> to vector<1x8x8xbf16>
    %24 = tpu.concatenate %20, %21, %22, %23 in 0 : vector<1x8x8xbf16>, vector<1x8x8xbf16>, vector<1x8x8xbf16>, vector<1x8x8xbf16> -> vector<4x8x8xbf16>
    %c0_8 = arith.constant 0 : index
    %c0_9 = arith.constant 0 : index
    %c0_10 = arith.constant 0 : index
    %25 = vector.load %arg7[%c0_8, %c0_9, %c0_10] : memref<4x8x8xbf16, #tpu.memory_space<vmem>>, vector<4x8x8xbf16>
    "tpu.trace_start"() <{level = 10 : i32, message = "hqd,hkd->hqk"}> : () -> ()
    %cst = arith.constant dense<0.000000e+00> : vector<4x8x8xf32>
    %26 = tpu.matmul %25, %15, %cst {dimension_numbers = #tpu.dot_dimension_numbers<[2], [2], [1], [1], [0, 0, 0, 1, 1, 1], [0], [0]>} : vector<4x8x8xbf16>, vector<4x8x8xbf16>, vector<4x8x8xf32> -> vector<4x8x8xf32>
    "tpu.trace_stop"() : () -> ()
    %c0_11 = arith.constant 0 : index
    %c0_12 = arith.constant 0 : index
    %c0_13 = arith.constant 0 : index
    %27 = vector.load %arg8[%c0_11, %c0_12, %c0_13] : memref<4x8x1xf32, #tpu.memory_space<vmem>>, vector<4x8x1xf32>
    %cst_14 = arith.constant dense<0xFF800000> : vector<4x8xf32>
    %28 = vector.multi_reduction <maximumf>, %26, %cst_14 [2] : vector<4x8x8xf32> to vector<4x8xf32>
    %29 = vector.shape_cast %28 : vector<4x8xf32> to vector<4x8x1xf32>
    %30 = arith.maximumf %27, %29 : vector<4x8x1xf32>
    %31 = arith.subf %27, %30 : vector<4x8x1xf32>
    %32 = math.exp %31 : vector<4x8x1xf32>
    %33 = vector.broadcast %30 : vector<4x8x1xf32> to vector<4x8x8xf32>
    %34 = arith.subf %26, %33 : vector<4x8x8xf32>
    %35 = math.exp %34 : vector<4x8x8xf32>
    %c0_15 = arith.constant 0 : index
    %c0_16 = arith.constant 0 : index
    %c0_17 = arith.constant 0 : index
    %36 = vector.load %arg9[%c0_15, %c0_16, %c0_17] : memref<4x8x1xf32, #tpu.memory_space<vmem>>, vector<4x8x1xf32>
    %37 = arith.mulf %32, %36 : vector<4x8x1xf32>
    %cst_18 = arith.constant dense<0.000000e+00> : vector<4x8xf32>
    %38 = vector.multi_reduction <add>, %35, %cst_18 [2] : vector<4x8x8xf32> to vector<4x8xf32>
    %39 = vector.shape_cast %38 : vector<4x8xf32> to vector<4x8x1xf32>
    %40 = arith.addf %37, %39 : vector<4x8x1xf32>
    %c0_19 = arith.constant 0 : index
    %c0_20 = arith.constant 0 : index
    %c0_21 = arith.constant 0 : index
    %41 = vector.load %arg9[%c0_19, %c0_20, %c0_21] : memref<4x8x1xf32, #tpu.memory_space<vmem>>, vector<4x8x1xf32>
    tpu.vector_store %arg9[%c0_19, %c0_20, %c0_21], %40 {strides = array<i32>} : memref<4x8x1xf32, #tpu.memory_space<vmem>>, vector<4x8x1xf32>,
    %c0_22 = arith.constant 0 : index
    %c0_23 = arith.constant 0 : index
    %c0_24 = arith.constant 0 : index
    %42 = vector.load %arg10[%c0_22, %c0_23, %c0_24] : memref<4x8x8xf32, #tpu.memory_space<vmem>>, vector<4x8x8xf32>
    %43 = vector.broadcast %32 : vector<4x8x1xf32> to vector<4x8x8xf32>
    %44 = arith.mulf %43, %42 : vector<4x8x8xf32>
    %45 = arith.truncf %35 : vector<4x8x8xf32> to vector<4x8x8xbf16>
    "tpu.trace_start"() <{level = 10 : i32, message = "hqk,hkd->hqd"}> : () -> ()
    %cst_25 = arith.constant dense<0.000000e+00> : vector<4x8x8xf32>
    %46 = tpu.matmul %45, %24, %cst_25 {dimension_numbers = #tpu.dot_dimension_numbers<[2], [1], [1], [2], [0, 0, 0, 1, 1, 2], [0], [0]>} : vector<4x8x8xbf16>, vector<4x8x8xbf16>, vector<4x8x8xf32> -> vector<4x8x8xf32>
    "tpu.trace_stop"() : () -> ()
    %47 = arith.addf %44, %46 : vector<4x8x8xf32>
    %c0_26 = arith.constant 0 : index
    %c0_27 = arith.constant 0 : index
    %c0_28 = arith.constant 0 : index
    %48 = vector.load %arg10[%c0_26, %c0_27, %c0_28] : memref<4x8x8xf32, #tpu.memory_space<vmem>>, vector<4x8x8xf32>
    tpu.vector_store %arg10[%c0_26, %c0_27, %c0_28], %47 {strides = array<i32>} : memref<4x8x8xf32, #tpu.memory_space<vmem>>, vector<4x8x8xf32>,
    %c0_29 = arith.constant 0 : index
    %c0_30 = arith.constant 0 : index
    %c0_31 = arith.constant 0 : index
    %49 = vector.load %arg8[%c0_29, %c0_30, %c0_31] : memref<4x8x1xf32, #tpu.memory_space<vmem>>, vector<4x8x1xf32>
    tpu.vector_store %arg8[%c0_29, %c0_30, %c0_31], %30 {strides = array<i32>} : memref<4x8x1xf32, #tpu.memory_space<vmem>>, vector<4x8x1xf32>,
    %c0_i32_32 = arith.constant 0 : i32
    %50 = arith.cmpi eq, %arg2, %c0_i32_32 : i32
    %51 = arith.extui %50 : i1 to i32
    %c0_i32_33 = arith.constant 0 : i32
    %52 = arith.cmpi ne, %51, %c0_i32_33 : i32
    scf.if %52 {
      %c0_34 = arith.constant 0 : index
      %c0_35 = arith.constant 0 : index
      %c0_36 = arith.constant 0 : index
      %53 = vector.load %arg9[%c0_34, %c0_35, %c0_36] : memref<4x8x1xf32, #tpu.memory_space<vmem>>, vector<4x8x1xf32>
      %54 = tpu.reciprocal %53 {approx = true} : vector<4x8x1xf32> -> vector<4x8x1xf32>
      %c0_37 = arith.constant 0 : index
      %c0_38 = arith.constant 0 : index
      %c0_39 = arith.constant 0 : index
      %55 = vector.load %arg10[%c0_37, %c0_38, %c0_39] : memref<4x8x8xf32, #tpu.memory_space<vmem>>, vector<4x8x8xf32>
      %56 = vector.broadcast %54 : vector<4x8x1xf32> to vector<4x8x8xf32>
      %57 = arith.mulf %55, %56 : vector<4x8x8xf32>
      %58 = vector.extract_strided_slice %57 {offsets = [0, 0, 0], sizes = [1, 8, 8], strides = [1, 1, 1]} : vector<4x8x8xf32> to vector<1x8x8xf32>
      %59 = vector.shape_cast %58 : vector<1x8x8xf32> to vector<8x8xf32>
      %60 = vector.extract_strided_slice %57 {offsets = [1, 0, 0], sizes = [1, 8, 8], strides = [1, 1, 1]} : vector<4x8x8xf32> to vector<1x8x8xf32>
      %61 = vector.shape_cast %60 : vector<1x8x8xf32> to vector<8x8xf32>
      %62 = vector.extract_strided_slice %57 {offsets = [2, 0, 0], sizes = [1, 8, 8], strides = [1, 1, 1]} : vector<4x8x8xf32> to vector<1x8x8xf32>
      %63 = vector.shape_cast %62 : vector<1x8x8xf32> to vector<8x8xf32>
      %64 = vector.extract_strided_slice %57 {offsets = [3, 0, 0], sizes = [1, 8, 8], strides = [1, 1, 1]} : vector<4x8x8xf32> to vector<1x8x8xf32>
      %65 = vector.shape_cast %64 : vector<1x8x8xf32> to vector<8x8xf32>
      %66 = tpu.concatenate %59, %61, %63, %65 in 1 : vector<8x8xf32>, vector<8x8xf32>, vector<8x8xf32>, vector<8x8xf32> -> vector<8x32xf32>
      %67 = arith.truncf %66 : vector<8x32xf32> to vector<8x32xbf16>
      %c0_40 = arith.constant 0 : index
      %c0_41 = arith.constant 0 : index
      %c0_42 = arith.constant 0 : index
      %68 = vector.load %arg6[%c0_40, %c0_41, %c0_42] : memref<1x8x32xbf16, #tpu.memory_space<vmem>>, vector<1x8x32xbf16>
      %69 = vector.shape_cast %68 : vector<1x8x32xbf16> to vector<8x32xbf16>
      %70 = vector.shape_cast %67 : vector<8x32xbf16> to vector<1x8x32xbf16>
      tpu.vector_store %arg6[%c0_40, %c0_41, %c0_42], %70 {strides = array<i32>} : memref<1x8x32xbf16, #tpu.memory_space<vmem>>, vector<1x8x32xbf16>,
    } else {
    }
    return
  }
  func.func @transform_0(%arg0: i32, %arg1: i32, %arg2: i32) -> (i32, i32, i32, i32) {
    %c0_i32 = arith.constant 0 : i32
    %c0_i32_0 = arith.constant 0 : i32
    %c0_i32_1 = arith.constant 0 : i32
    return %c0_i32, %arg0, %arg1, %c0_i32_0 : i32, i32, i32, i32
  }
  func.func @transform_1(%arg0: i32, %arg1: i32, %arg2: i32) -> (i32, i32, i32, i32) {
    %c1_i32 = arith.constant 1 : i32
    %c0_i32 = arith.constant 0 : i32
    %c0_i32_0 = arith.constant 0 : i32
    return %c1_i32, %arg0, %arg2, %c0_i32 : i32, i32, i32, i32
  }
  func.func @transform_2(%arg0: i32, %arg1: i32, %arg2: i32) -> (i32, i32, i32, i32) {
    %c2_i32 = arith.constant 2 : i32
    %c0_i32 = arith.constant 0 : i32
    %c0_i32_0 = arith.constant 0 : i32
    return %c2_i32, %arg0, %arg2, %c0_i32 : i32, i32, i32, i32
  }
  func.func @transform_3(%arg0: i32, %arg1: i32, %arg2: i32) -> (i32, i32, i32) {
    %c0_i32 = arith.constant 0 : i32
    %c0_i32_0 = arith.constant 0 : i32
    return %arg0, %arg1, %c0_i32 : i32, i32, i32
  }
}

module attributes {stable_mosaic.version = 11 : i64} {
  func.func @_linear_kernel(%arg0: i32, %arg1: i32, %arg2: i32, %arg3: memref<16x32xbf16, #tpu.memory_space<vmem>>, %arg4: memref<32x32xbf16, #tpu.memory_space<vmem>>, %arg5: memref<1x32xf32, #tpu.memory_space<vmem>>, %arg6: memref<16x32xf32, #tpu.memory_space<vmem>>, %arg7: memref<16x32xf32, #tpu.memory_space<vmem>>) attributes {dimension_semantics = [#tpu.dimension_semantics<parallel>, #tpu.dimension_semantics<parallel>, #tpu.dimension_semantics<arbitrary>], iteration_bounds = array<i64: 1, 1, 1>, scalar_prefetch = 0 : i64, scratch_operands = 1 : i64, tpu.core_type = #tpu.core_type<tc>, window_params = [{transform_indices = @transform_0, window_bounds = array<i64: 16, 32>}, {transform_indices = @transform_1, window_bounds = array<i64: 32, 32>}, {transform_indices = @transform_2, window_bounds = array<i64: 1, 32>}, {transform_indices = @transform_3, window_bounds = array<i64: 16, 32>}]} {
    %c0_i32 = arith.constant 0 : i32
    %0 = arith.cmpi eq, %arg2, %c0_i32 : i32
    %1 = arith.extui %0 : i1 to i32
    %c0_i32_0 = arith.constant 0 : i32
    %2 = arith.cmpi ne, %1, %c0_i32_0 : i32
    scf.if %2 {
      %cst_10 = arith.constant 0.000000e+00 : f32
      %12 = vector.broadcast %cst_10 : f32 to vector<16x32xf32>
      %c0_11 = arith.constant 0 : index
      %c0_12 = arith.constant 0 : index
      %13 = vector.load %arg7[%c0_11, %c0_12] : memref<16x32xf32, #tpu.memory_space<vmem>>, vector<16x32xf32>
      tpu.vector_store %arg7[%c0_11, %c0_12], %12 {strides = array<i32>} : memref<16x32xf32, #tpu.memory_space<vmem>>, vector<16x32xf32>,
    } else {
    }
    %c0 = arith.constant 0 : index
    %c0_1 = arith.constant 0 : index
    %3 = vector.load %arg7[%c0, %c0_1] : memref<16x32xf32, #tpu.memory_space<vmem>>, vector<16x32xf32>
    %c0_2 = arith.constant 0 : index
    %c0_3 = arith.constant 0 : index
    %4 = vector.load %arg3[%c0_2, %c0_3] : memref<16x32xbf16, #tpu.memory_space<vmem>>, vector<16x32xbf16>
    %c0_4 = arith.constant 0 : index
    %c0_5 = arith.constant 0 : index
    %5 = vector.load %arg4[%c0_4, %c0_5] : memref<32x32xbf16, #tpu.memory_space<vmem>>, vector<32x32xbf16>
    %cst = arith.constant dense<0.000000e+00> : vector<16x32xf32>
    %6 = tpu.matmul %4, %5, %cst {dimension_numbers = #tpu.dot_dimension_numbers<[1], [0], [0], [1], [0, 0, 1, 1], [], []>} : vector<16x32xbf16>, vector<32x32xbf16>, vector<16x32xf32> -> vector<16x32xf32>
    %7 = arith.addf %3, %6 : vector<16x32xf32>
    %c0_6 = arith.constant 0 : index
    %c0_7 = arith.constant 0 : index
    %8 = vector.load %arg7[%c0_6, %c0_7] : memref<16x32xf32, #tpu.memory_space<vmem>>, vector<16x32xf32>
    tpu.vector_store %arg7[%c0_6, %c0_7], %7 {strides = array<i32>} : memref<16x32xf32, #tpu.memory_space<vmem>>, vector<16x32xf32>,
    %c0_i32_8 = arith.constant 0 : i32
    %9 = arith.cmpi eq, %arg2, %c0_i32_8 : i32
    %10 = arith.extui %9 : i1 to i32
    %c0_i32_9 = arith.constant 0 : i32
    %11 = arith.cmpi ne, %10, %c0_i32_9 : i32
    scf.if %11 {
      %c0_10 = arith.constant 0 : index
      %c0_11 = arith.constant 0 : index
      %12 = vector.load %arg7[%c0_10, %c0_11] : memref<16x32xf32, #tpu.memory_space<vmem>>, vector<16x32xf32>
      %c0_12 = arith.constant 0 : index
      %c0_13 = arith.constant 0 : index
      %13 = vector.load %arg5[%c0_12, %c0_13] : memref<1x32xf32, #tpu.memory_space<vmem>>, vector<1x32xf32>
      %14 = vector.broadcast %13 : vector<1x32xf32> to vector<16x32xf32>
      %15 = arith.addf %12, %14 : vector<16x32xf32>
      %c0_14 = arith.constant 0 : index
      %c0_15 = arith.constant 0 : index
      %16 = vector.load %arg6[%c0_14, %c0_15] : memref<16x32xf32, #tpu.memory_space<vmem>>, vector<16x32xf32>
      tpu.vector_store %arg6[%c0_14, %c0_15], %15 {strides = array<i32>} : memref<16x32xf32, #tpu.memory_space<vmem>>, vector<16x32xf32>,
    } else {
    }
    return
  }
  func.func @transform_0(%arg0: i32, %arg1: i32, %arg2: i32) -> (i32, i32) {
    %c0_i32 = arith.constant 0 : i32
    return %arg0, %arg2 : i32, i32
  }
  func.func @transform_1(%arg0: i32, %arg1: i32, %arg2: i32) -> (i32, i32) {
    %c0_i32 = arith.constant 0 : i32
    return %arg2, %arg1 : i32, i32
  }
  func.func @transform_2(%arg0: i32, %arg1: i32, %arg2: i32) -> (i32, i32) {
    %c0_i32 = arith.constant 0 : i32
    %c0_i32_0 = arith.constant 0 : i32
    return %c0_i32, %arg1 : i32, i32
  }
  func.func @transform_3(%arg0: i32, %arg1: i32, %arg2: i32) -> (i32, i32) {
    %c0_i32 = arith.constant 0 : i32
    return %arg0, %arg1 : i32, i32
  }
}

</mosaic_0001>

<llo_original>
// kernel: multi_head_attention.5
$region0: #{multi_head_attention.5}
  #allocation0 [shape = 'u32[]', space=smem, size = 0x4, offset = 0x4, fixed_abs, tag = 'smem constant byte address 0x4 - core index']
  #allocation1 [shape = 'u32[144,128]{1,0:T(1,128)}', space=vmem, size = 0x12000, scoped, tag = 'internal scratch']
  #allocation2 [shape = 'f32[16,32]{1,0:T(8,128)}', space=vmem, size = 0x2000, scoped, tag = 'scratch operand']
  %s0 = inlined_call_operand.vmem [shape: bf16[16,32], index: 0, kind: input, shape index: {}]
  %s1 = inlined_call_operand.vmem [shape: bf16[32,32], index: 1, kind: input, shape index: {}]
  %s2 = inlined_call_operand.vmem [shape: f32[1,32], index: 2, kind: input, shape index: {}]
  %s3 = inlined_call_operand.hbm [shape: f32[16,32], index: 3, kind: output, shape index: {}]
  %s4 = sld [smem:[#allocation0]]
  $region30: #{multi_head_attention.5} parent=0
    _
  %s6 = ssub.s32 1, %s4
  %s7 = scalar_select 0, %s6, %s4
  $region1: #{multi_head_attention.5} parent=0
    #allocation3 [shape = 'u8[8192]{0}', space=vmem, size = 0x2000, scoped, tag = 'output window, operand 0, single buffered']
    #allocation4 [shape = 's32[1]{0}', space=sflag, size = 0x4, scoped, tag = 'scoped memory for multi_head_attention.5']
    %8 = vsyncpa [#allocation4], 0
    // Predicated region
    $region2: #{multi_head_attention.5} parent=1 // pred_check
      _
    $region3: #{multi_head_attention.5} parent=1 // pred_check_branch
      %10 = sbr.rel (0) target = $region5
    $region4: #{multi_head_attention.5} parent=1 // pred_region
      _
    $region5: #{multi_head_attention.5} parent=1 // pred_fallthru
      _
    // Predicated region
    $region6: #{multi_head_attention.5} parent=1 // pred_check
      _
    $region7: #{multi_head_attention.5} parent=1 // pred_check_branch
      %12 = sbr.rel (0) target = $region9
    $region8: #{multi_head_attention.5} parent=1 // pred_region
      _
    $region9: #{multi_head_attention.5} parent=1 // pred_fallthru
      _
    // Predicated region
    $region10: #{multi_head_attention.5} parent=1 // pred_check
      _
    $region11: #{multi_head_attention.5} parent=1 // pred_check_branch
      %14 = sbr.rel (0) target = $region13
    $region12: #{multi_head_attention.5} parent=1 // pred_region
      _
    $region13: #{multi_head_attention.5} parent=1 // pred_fallthru
      _
    %p16 = scmp.eq.s32.totalorder 0, 0
    // Predicated region
    $region14: #{multi_head_attention.5} parent=1 // pred_check
      %p17 = pneg %p16
    $region15: #{multi_head_attention.5} parent=1 // pred_check_branch
      %19 = sbr.rel (%p17) target = $region17
    $region16: #{multi_head_attention.5} parent=1 // pred_region
      %vm20 = vcmask 261120
      %21 = vst.msk [vmem:[#allocation2] sm:$0xff] %vm20, 0.0
      %22 = vst.msk [vmem:[#allocation2 + $0x8] sm:$0xff] %vm20, 0.0
    $region17: #{multi_head_attention.5} parent=1 // pred_fallthru
      _
    %v23 = vld [vmem:[#allocation2] sm:$0xff]
    %v24 = vld [vmem:[#allocation2 + $0x8] sm:$0xff]
    %v25 = vld [vmem:[%s0] sm:$0xf]
    %v26 = vld [vmem:[%s0 + $0x4] sm:$0xf]
    %v27 = vld [vmem:[%s1] sm:$0xf]
    %v28 = vld [vmem:[%s1 + $0x4] sm:$0xf]
    %v29 = vld [vmem:[%s1 + $0x8] sm:$0xf]
    %v30 = vld [vmem:[%s1 + $0xc] sm:$0xf]
    %v33 = vunpack.c.l.b16 %v25
    %v34 = vunpack.c.l.b16 %v26
    %v35 = vpack.c.b16 %v34, %v33
    %v40 = vunpack.c.l.b16 %v27
    %v41 = vunpack.c.l.b16 %v28
    %v42 = vunpack.c.l.b16 %v29
    %v43 = vunpack.c.l.b16 %v30
    %v44 = vpack.c.b16 %v41, %v40
    %v45 = vpack.c.b16 %v43, %v42
    %vm48 = vcmask 261120
    %v50 = vsel %vm48, %v35, 0
    %52 = vmatprep.subr.bf16.mxu0 0
    %53 = vmatpush1.bf16.msra.mxu0 %v44
    %54 = vmatprep.subr.bf16.mxu0 0
    %55 = vmatpush1.bf16.msra.mxu0 %v45
    %56 = vmatprep.subr.bf16.mxu0 0
    %57 = vmatpush1.bf16.msra.mxu0 0
    %58 = vmatprep.subr.bf16.mxu0 0
    %59 = vmatpush1.bf16.msra.mxu0 0
    %60 = vmatprep.subr.bf16.mxu0 0
    %61 = vmatpush1.bf16.msra.mxu0 0
    %62 = vmatprep.subr.bf16.mxu0 0
    %63 = vmatpush1.bf16.msra.mxu0 0
    %64 = vmatprep.subr.bf16.mxu0 0
    %65 = vmatpush1.bf16.msra.mxu0 0
    %66 = vmatprep.subr.bf16.mxu0 0
    %67 = vmatpush1.bf16.msra.mxu0 0
    %68 = vmatprep.subr.bf16.mxu0 0
    %69 = vmatpush1.bf16.msra.mxu0 0
    %70 = vmatprep.subr.bf16.mxu0 0
    %71 = vmatpush1.bf16.msra.mxu0 0
    %72 = vmatprep.subr.bf16.mxu0 0
    %73 = vmatpush1.bf16.msra.mxu0 0
    %74 = vmatprep.subr.bf16.mxu0 0
    %75 = vmatpush1.bf16.msra.mxu0 0
    %76 = vmatprep.subr.bf16.mxu0 0
    %77 = vmatpush1.bf16.msra.mxu0 0
    %78 = vmatprep.subr.bf16.mxu0 0
    %79 = vmatpush1.bf16.msra.mxu0 0
    %80 = vmatprep.subr.bf16.mxu0 0
    %81 = vmatpush1.bf16.msra.mxu0 0
    %82 = vmatprep.subr.bf16.mxu0 0
    %83 = vmatpush1.bf16.msra.mxu0 0
    %84 = vmatprep.mubr.bf16.mxu0 0
    %85 = vmatmul.mubr.bf16.gmra.mrb[0].mxu0 %v50
    %v86 = vpop.f32.mrb[0].mxu0
    %v87 = vadd.f32 0.0, %v86
    %v88 = vpop.f32.mrb[0].mxu0
    %v89 = vpop.f32.mrb[0].mxu0
    %v90 = vadd.f32 0.0, %v89
    %v91 = vpop.f32.mrb[0].mxu0
    %92 = vdwg.mxu0
    %v93 = vadd.f32 %v23, %v87
    %v94 = vadd.f32 %v24, %v90
    %95 = vst.msk [vmem:[#allocation2] sm:$0xff] %vm48, %v93
    %96 = vst.msk [vmem:[#allocation2 + $0x8] sm:$0xff] %vm48, %v94
    // Predicated region
    $region18: #{multi_head_attention.5} parent=1 // pred_check
      %p97 = pneg %p16
    $region19: #{multi_head_attention.5} parent=1 // pred_check_branch
      %99 = sbr.rel (%p97) target = $region21
    $region20: #{multi_head_attention.5} parent=1 // pred_region
      %v100 = vld [vmem:[#allocation2] sm:$0xff]
      %v101 = vld [vmem:[#allocation2 + $0x8] sm:$0xff]
      %v102 = vld [vmem:[%s2] sm:$0x1]
      %v104 = vlaneseq
      %v105 = vshrl.u32 %v104, 7
      %v106 = vsub.s32 0, %v105
      %v107 = vrot.slane %v102, %v106
      %v109 = vadd.f32 %v100, %v107
      %v110 = vadd.f32 %v101, %v107
      %111 = vst.msk [vmem:[#allocation3] sm:$0xff] %vm48, %v109
      %112 = vst.msk [vmem:[#allocation3 + $0x8] sm:$0xff] %vm48, %v110
    $region21: #{multi_head_attention.5} parent=1 // pred_fallthru
      _
    // Predicated region
    $region22: #{multi_head_attention.5} parent=1 // pred_check
      _
    $region23: #{multi_head_attention.5} parent=1 // pred_check_branch
      %114 = sbr.rel (0) target = $region25
    $region24: #{multi_head_attention.5} parent=1 // pred_region
      %s116 = ssub.s32 256, 256
      %117 = vsyncadd [#allocation4], %s116
      %s118 = sshll.u32 [#allocation3], 4
      %s119 = int_to_ptr.vmem [resolvable:$true] %s118
      %124 = dma.vmem_to_hbm [thread:$0]  %s119, 256, %s3, [#allocation4], 128, 128, 8
    $region25: #{multi_head_attention.5} parent=1 // pred_fallthru
      _
    // Predicated region
    $region26: #{multi_head_attention.5} parent=1 // pred_check
      _
    $region27: #{multi_head_attention.5} parent=1 // pred_check_branch
      %126 = sbr.rel (0) target = $region29
    $region28: #{multi_head_attention.5} parent=1 // pred_region
      %127 = dma.done [#allocation4], 256
    $region29: #{multi_head_attention.5} parent=1 // pred_fallthru
      _
    %128 = vsyncpa [#allocation4], 1

// kernel: multi_head_attention.3
$region0: #{multi_head_attention.3}
  #allocation0 [shape = 'u32[]', space=smem, size = 0x4, offset = 0x4, fixed_abs, tag = 'smem constant byte address 0x4 - core index']
  #allocation1 [shape = 'u32[144,128]{1,0:T(1,128)}', space=vmem, size = 0x12000, scoped, tag = 'internal scratch']
  #allocation2 [shape = 'f32[16,32]{1,0:T(8,128)}', space=vmem, size = 0x2000, scoped, tag = 'scratch operand']
  %s0 = inlined_call_operand.vmem [shape: bf16[16,32], index: 0, kind: input, shape index: {}]
  %s1 = inlined_call_operand.vmem [shape: bf16[3,32,32], index: 1, kind: input, shape index: {}]
  %s2 = inlined_call_operand.vmem [shape: f32[3,1,32], index: 2, kind: input, shape index: {}]
  %s3 = inlined_call_operand.vmem [shape: bf16[3,16,32], index: 3, kind: output, shape index: {}]
  %s4 = sld [smem:[#allocation0]]
  $region53: #{multi_head_attention.3} parent=0
    _
  %s6 = ssub.s32 1, %s4
  %s7 = scalar_select 0, %s6, %s4
  loop: start=0, step=1, limit=5
  $region2: #{multi_head_attention.3} parent=0 // loop_pre_header
    _
  $region3: #{multi_head_attention.3} parent=0 // loop_header
    %s9 = sphi 0, %s13
    %p10 = scmp.ge.s32.totalorder %s9, 5
    %s16 = sphi 0, %s42
    %s17 = sphi 0, %s38
    %s18 = sphi 0, %s34
    %s19 = sphi 0, %s30
    %s20 = sphi 0, %s16
    %s21 = sphi 0, %s17
    %s22 = sphi 0, %s18
    %s23 = sphi 0, %s19
    %s24 = sphi 0, %s20
    %s25 = sphi 0, %s21
    %s26 = sphi 0, %s22
    %s27 = sphi 0, %s23
    %s47 = sphi 0, %s49
    %s50 = sphi 0, %s47
    %s51 = sphi 0, %s50
    %s67 = sphi 0, %s51
    %s77 = sphi 0, %s79
    %s80 = sphi 0, %s77
    %s81 = sphi 0, %s80
    %s97 = sphi 0, %s81
    %s105 = sphi 0, %s107
    %s108 = sphi 0, %s105
    %s109 = sphi 0, %s108
    %s125 = sphi 0, %s109
    %s135 = sphi 0, %s137
    %s138 = sphi 0, %s135
    %s139 = sphi 0, %s138
    %s155 = sphi 0, %s139
  $region4: #{multi_head_attention.3} parent=0 // loop_header_branch
    %12 = sbr.rel (%p10) target = $region8
  $region5: #{multi_head_attention.3} parent=0 // loop_body
    %s14 = ssub.s32 %s9, 1
    %s15 = ssub.s32 %s9, 2
    %s28 = sadd.s32 1, %s19
    %p29 = scmp.ge.s32.totalorder %s28, 1
    %s30 = scalar_select %p29, 0, %s28
    %s31 = sadd.s32 1, %s18
    %s32 = scalar_select %p29, %s31, %s18
    %p33 = scmp.ge.s32.totalorder %s32, 1
    %s34 = scalar_select %p33, 0, %s32
    %s35 = sadd.s32 1, %s17
    %s36 = scalar_select %p33, %s35, %s17
    %p37 = scmp.ge.s32.totalorder %s36, 1
    %s38 = scalar_select %p37, 0, %s36
    %s39 = sadd.s32 1, %s16
    %s40 = scalar_select %p37, %s39, %s16
    %p41 = scmp.ge.s32.totalorder %s40, 3
    %s42 = scalar_select %p41, 0, %s40
    %s43 = ssub.s32 %s17, %s38
    %s44 = ssub.s32 %s19, %s30
    %s45 = sor.u32 %s43, %s44
    %p46 = scmp.eq.s32.totalorder %s45, 0
    %s48 = sadd.s32 %s47, 1
    %s49 = scalar_select %p46, %s47, %s48
    %p52 = pneg %p46
    %p53 = scmp.eq.s32.totalorder %s9, 2
    %p54 = por %p52, %p53
    %p55 = scmp.ne.s32.totalorder %s47, %s50
    %p56 = scmp.eq.s32.totalorder %s9, 0
    %p57 = por %p55, %p56
    %p58 = scmp.ne.s32.totalorder %s47, %s50
    %p59 = scmp.eq.s32.totalorder %s14, 2
    %p60 = por %p58, %p59
    %p61 = scmp.ne.s32.totalorder %s50, %s51
    %p62 = scmp.eq.s32.totalorder %s14, 0
    %p63 = por %p61, %p62
    %p64 = scmp.ne.s32.totalorder %s50, %s51
    %p65 = scmp.eq.s32.totalorder %s15, 2
    %p66 = por %p64, %p65
    %p68 = scmp.ne.s32.totalorder %s51, %s67
    %p69 = scmp.eq.s32.totalorder %s15, 0
    %p70 = por %p68, %p69
    %s71 = ssub.s32 %s16, %s42
    %s72 = ssub.s32 %s19, %s30
    %s73 = sor.u32 %s71, %s72
    %s74 = ssub.s32 %s18, %s34
    %s75 = sor.u32 %s73, %s74
    %p76 = scmp.eq.s32.totalorder %s75, 0
    %s78 = sadd.s32 %s77, 1
    %s79 = scalar_select %p76, %s77, %s78
    %p82 = pneg %p76
    %p83 = scmp.eq.s32.totalorder %s9, 2
    %p84 = por %p82, %p83
    %p85 = scmp.ne.s32.totalorder %s77, %s80
    %p86 = scmp.eq.s32.totalorder %s9, 0
    %p87 = por %p85, %p86
    %p88 = scmp.ne.s32.totalorder %s77, %s80
    %p89 = scmp.eq.s32.totalorder %s14, 2
    %p90 = por %p88, %p89
    %p91 = scmp.ne.s32.totalorder %s80, %s81
    %p92 = scmp.eq.s32.totalorder %s14, 0
    %p93 = por %p91, %p92
    %p94 = scmp.ne.s32.totalorder %s80, %s81
    %p95 = scmp.eq.s32.totalorder %s15, 2
    %p96 = por %p94, %p95
    %p98 = scmp.ne.s32.totalorder %s81, %s97
    %p99 = scmp.eq.s32.totalorder %s15, 0
    %p100 = por %p98, %p99
    %s101 = ssub.s32 %s16, %s42
    %s102 = ssub.s32 %s18, %s34
    %s103 = sor.u32 %s101, %s102
    %p104 = scmp.eq.s32.totalorder %s103, 0
    %s106 = sadd.s32 %s105, 1
    %s107 = scalar_select %p104, %s105, %s106
    %p110 = pneg %p104
    %p111 = scmp.eq.s32.totalorder %s9, 2
    %p112 = por %p110, %p111
    %p113 = scmp.ne.s32.totalorder %s105, %s108
    %p114 = scmp.eq.s32.totalorder %s9, 0
    %p115 = por %p113, %p114
    %p116 = scmp.ne.s32.totalorder %s105, %s108
    %p117 = scmp.eq.s32.totalorder %s14, 2
    %p118 = por %p116, %p117
    %p119 = scmp.ne.s32.totalorder %s108, %s109
    %p120 = scmp.eq.s32.totalorder %s14, 0
    %p121 = por %p119, %p120
    %p122 = scmp.ne.s32.totalorder %s108, %s109
    %p123 = scmp.eq.s32.totalorder %s15, 2
    %p124 = por %p122, %p123
    %p126 = scmp.ne.s32.totalorder %s109, %s125
    %p127 = scmp.eq.s32.totalorder %s15, 0
    %p128 = por %p126, %p127
    %s129 = ssub.s32 %s16, %s42
    %s130 = ssub.s32 %s17, %s38
    %s131 = sor.u32 %s129, %s130
    %s132 = ssub.s32 %s18, %s34
    %s133 = sor.u32 %s131, %s132
    %p134 = scmp.eq.s32.totalorder %s133, 0
    %s136 = sadd.s32 %s135, 1
    %s137 = scalar_select %p134, %s135, %s136
    %p140 = pneg %p134
    %p141 = scmp.eq.s32.totalorder %s9, 2
    %p142 = por %p140, %p141
    %p143 = scmp.ne.s32.totalorder %s135, %s138
    %p144 = scmp.eq.s32.totalorder %s9, 0
    %p145 = por %p143, %p144
    %p146 = scmp.ne.s32.totalorder %s135, %s138
    %p147 = scmp.eq.s32.totalorder %s14, 2
    %p148 = por %p146, %p147
    %p149 = scmp.ne.s32.totalorder %s138, %s139
    %p150 = scmp.eq.s32.totalorder %s14, 0
    %p151 = por %p149, %p150
    %p152 = scmp.ne.s32.totalorder %s138, %s139
    %p153 = scmp.eq.s32.totalorder %s15, 2
    %p154 = por %p152, %p153
    %p156 = scmp.ne.s32.totalorder %s139, %s155
    %p157 = scmp.eq.s32.totalorder %s15, 0
    %p158 = por %p156, %p157
    %p159 = scmp.le.s32.totalorder 1, %s9
    %p160 = scmp.lt.s32.totalorder %s9, 4
    %p161 = pnand %p159, %p160
    %p162 = pneg %p161
    // Predicated region
    $region9: #{multi_head_attention.3} parent=5 // pred_check
      _
    $region10: #{multi_head_attention.3} parent=5 // pred_check_branch
      %164 = sbr.rel (%p161) target = $region12
    $region11: #{multi_head_attention.3} parent=5 // pred_region
      %s165 = ssub.s32 %s9, 1
      // Predicated region
      $region13: #{multi_head_attention.3} parent=11 // pred_check
        %p166 = pneg %p63
      $region14: #{multi_head_attention.3} parent=11 // pred_check_branch
        %168 = sbr.rel (%p166) target = $region16
      $region15: #{multi_head_attention.3} parent=11 // pred_region
        %s169 = smul.u32 2, %s21
        %p170 = scmp.lt.s32.totalorder %s169, 1
        %s171 = scalar_select %p170, %s169, 1
        %p172 = scmp.lt.s32.totalorder %s23, 0
        %s173 = scalar_select %p172, %s23, 0
        %s174 = sadd.s32 %s173, %s171
        %s175 = smul.addr %s174, 4
        %s176 = scalar_lea.vmem %s0, %s175
        %s177 = smul.u32 2, %s21
      $region16: #{multi_head_attention.3} parent=11 // pred_fallthru
        _
    $region12: #{multi_head_attention.3} parent=5 // pred_fallthru
      _
    %p178 = scmp.lt.s32.totalorder %s9, 3
    // Predicated region
    $region17: #{multi_head_attention.3} parent=5 // pred_check
      %p179 = pneg %p178
    $region18: #{multi_head_attention.3} parent=5 // pred_check_branch
      %181 = sbr.rel (%p179) target = $region20
    $region19: #{multi_head_attention.3} parent=5 // pred_region
      // Predicated region
      $region21: #{multi_head_attention.3} parent=19 // pred_check
        %p182 = pneg %p87
      $region22: #{multi_head_attention.3} parent=19 // pred_check_branch
        %184 = sbr.rel (%p182) target = $region24
      $region23: #{multi_head_attention.3} parent=19 // pred_region
        %s185 = smul.u32 4, %s19
        %p186 = scmp.lt.s32.totalorder %s16, 2
        %s187 = scalar_select %p186, %s16, 2
        %p188 = scmp.lt.s32.totalorder %s185, 3
        %s189 = scalar_select %p188, %s185, 3
        %p190 = scmp.lt.s32.totalorder %s18, 0
        %s191 = scalar_select %p190, %s18, 0
        %s192 = sadd.s32 %s191, %s189
        %s193 = smul.addr %s187, 4
        %s194 = sadd.s32 %s192, %s193
        %s195 = smul.addr %s194, 4
        %s196 = scalar_lea.vmem %s1, %s195
        %s197 = smul.u32 4, %s19
      $region24: #{multi_head_attention.3} parent=19 // pred_fallthru
        _
      // Predicated region
      $region25: #{multi_head_attention.3} parent=19 // pred_check
        %p198 = pneg %p115
      $region26: #{multi_head_attention.3} parent=19 // pred_check_branch
        %200 = sbr.rel (%p198) target = $region28
      $region27: #{multi_head_attention.3} parent=19 // pred_region
        %p201 = scmp.lt.s32.totalorder %s16, 2
        %s202 = scalar_select %p201, %s16, 2
        %p203 = scmp.lt.s32.totalorder %s18, 0
        %s204 = scalar_select %p203, %s18, 0
        %s205 = sadd.s32 %s204, %s202
        %s206 = scalar_lea.vmem %s2, %s205
      $region28: #{multi_head_attention.3} parent=19 // pred_fallthru
        _
    $region20: #{multi_head_attention.3} parent=5 // pred_fallthru
      _
    %p207 = scmp.le.s32.totalorder 1, %s9
    %p208 = scmp.lt.s32.totalorder %s9, 4
    %p209 = pnand %p207, %p208
    %p210 = pneg %p209
    // Predicated region
    $region29: #{multi_head_attention.3} parent=5 // pred_check
      _
    $region30: #{multi_head_attention.3} parent=5 // pred_check_branch
      %212 = sbr.rel (%p209) target = $region32
    $region31: #{multi_head_attention.3} parent=5 // pred_region
      %s213 = ssub.s32 %s9, 1
      %s214 = smul.u32 2, %s21
      %p215 = scmp.lt.s32.totalorder %s214, 1
      %s216 = scalar_select %p215, %s214, 1
      %p217 = scmp.lt.s32.totalorder %s23, 0
      %s218 = scalar_select %p217, %s23, 0
      %s219 = sadd.s32 %s218, %s216
      %s220 = smul.addr %s219, 4
      %s221 = scalar_lea.vmem %s0, %s220
      %p222 = pneg %p63
      %p223 = pneg %p60
      %s224 = smul.u32 4, %s23
      %p225 = scmp.lt.s32.totalorder %s20, 2
      %s226 = scalar_select %p225, %s20, 2
      %p227 = scmp.lt.s32.totalorder %s224, 3
      %s228 = scalar_select %p227, %s224, 3
      %p229 = scmp.lt.s32.totalorder %s22, 0
      %s230 = scalar_select %p229, %s22, 0
      %s231 = sadd.s32 %s230, %s228
      %s232 = smul.addr %s226, 4
      %s233 = sadd.s32 %s231, %s232
      %s234 = smul.addr %s233, 4
      %s235 = scalar_lea.vmem %s1, %s234
      %p236 = pneg %p93
      %p237 = pneg %p90
      %p238 = scmp.lt.s32.totalorder %s20, 2
      %s239 = scalar_select %p238, %s20, 2
      %p240 = scmp.lt.s32.totalorder %s22, 0
      %s241 = scalar_select %p240, %s22, 0
      %s242 = sadd.s32 %s241, %s239
      %s243 = scalar_lea.vmem %s2, %s242
      %p244 = pneg %p121
      %p245 = pneg %p118
      %p246 = pneg %p151
      %p247 = pneg %p148
      %s248 = smul.u32 2, %s21
      %p249 = scmp.lt.s32.totalorder %s20, 2
      %s250 = scalar_select %p249, %s20, 2
      %p251 = scmp.lt.s32.totalorder %s248, 1
      %s252 = scalar_select %p251, %s248, 1
      %p253 = scmp.lt.s32.totalorder %s22, 0
      %s254 = scalar_select %p253, %s22, 0
      %s255 = sadd.s32 %s254, %s252
      %s256 = smul.addr %s250, 2
      %s257 = sadd.s32 %s255, %s256
      %s258 = smul.addr %s257, 4
      %s259 = scalar_lea.vmem %s3, %s258
      %s260 = smul.u32 2, %s21
      %p261 = scmp.lt.s32.totalorder %s260, 1
      %s262 = scalar_select %p261, %s260, 1
      %p263 = scmp.lt.s32.totalorder %s23, 0
      %s264 = scalar_select %p263, %s23, 0
      %s265 = sadd.s32 %s264, %s262
      %s266 = smul.addr %s265, 4
      %s267 = scalar_lea.vmem %s0, %s266
      %s268 = smul.u32 2, %s21
      %s269 = smul.u32 4, %s23
      %p270 = scmp.lt.s32.totalorder %s20, 2
      %s271 = scalar_select %p270, %s20, 2
      %p272 = scmp.lt.s32.totalorder %s269, 3
      %s273 = scalar_select %p272, %s269, 3
      %p274 = scmp.lt.s32.totalorder %s22, 0
      %s275 = scalar_select %p274, %s22, 0
      %s276 = sadd.s32 %s275, %s273
      %s277 = smul.addr %s271, 4
      %s278 = sadd.s32 %s276, %s277
      %s279 = smul.addr %s278, 4
      %s280 = scalar_lea.vmem %s1, %s279
      %s281 = smul.u32 4, %s23
      %p282 = scmp.lt.s32.totalorder %s20, 2
      %s283 = scalar_select %p282, %s20, 2
      %p284 = scmp.lt.s32.totalorder %s22, 0
      %s285 = scalar_select %p284, %s22, 0
      %s286 = sadd.s32 %s285, %s283
      %s287 = scalar_lea.vmem %s2, %s286
      %s288 = smul.u32 2, %s21
      %p289 = scmp.lt.s32.totalorder %s20, 2
      %s290 = scalar_select %p289, %s20, 2
      %p291 = scmp.lt.s32.totalorder %s288, 1
      %s292 = scalar_select %p291, %s288, 1
      %p293 = scmp.lt.s32.totalorder %s22, 0
      %s294 = scalar_select %p293, %s22, 0
      %s295 = sadd.s32 %s294, %s292
      %s296 = smul.addr %s290, 2
      %s297 = sadd.s32 %s295, %s296
      %s298 = smul.addr %s297, 4
      %s299 = scalar_lea.vmem %s3, %s298
      %s300 = smul.u32 2, %s21
      %p302 = scmp.eq.s32.totalorder %s23, 0
      // Predicated region
      $region33: #{multi_head_attention.3} parent=31 // pred_check
        %p303 = pneg %p302
      $region34: #{multi_head_attention.3} parent=31 // pred_check_branch
        %305 = sbr.rel (%p303) target = $region36
      $region35: #{multi_head_attention.3} parent=31 // pred_region
        %vm306 = vcmask 261120
        %307 = vst.msk [vmem:[#allocation2] sm:$0xff] %vm306, 0.0
        %308 = vst.msk [vmem:[#allocation2 + $0x8] sm:$0xff] %vm306, 0.0
      $region36: #{multi_head_attention.3} parent=31 // pred_fallthru
        _
      %v309 = vld [vmem:[#allocation2] sm:$0xff]
      %v310 = vld [vmem:[#allocation2 + $0x8] sm:$0xff]
      %v311 = vld [vmem:[%s267] sm:$0xf]
      %v312 = vld [vmem:[%s267 + $0x4] sm:$0xf]
      %v313 = vld [vmem:[%s280] sm:$0xf]
      %v314 = vld [vmem:[%s280 + $0x4] sm:$0xf]
      %v315 = vld [vmem:[%s280 + $0x8] sm:$0xf]
      %v316 = vld [vmem:[%s280 + $0xc] sm:$0xf]
      %v319 = vunpack.c.l.b16 %v311
      %v320 = vunpack.c.l.b16 %v312
      %v321 = vpack.c.b16 %v320, %v319
      %v326 = vunpack.c.l.b16 %v313
      %v327 = vunpack.c.l.b16 %v314
      %v328 = vunpack.c.l.b16 %v315
      %v329 = vunpack.c.l.b16 %v316
      %v330 = vpack.c.b16 %v327, %v326
      %v331 = vpack.c.b16 %v329, %v328
      %vm334 = vcmask 261120
      %v336 = vsel %vm334, %v321, 0
      %338 = vmatprep.subr.bf16.mxu0 0
      %339 = vmatpush1.bf16.msra.mxu0 %v330
      %340 = vmatprep.subr.bf16.mxu0 0
      %341 = vmatpush1.bf16.msra.mxu0 %v331
      %342 = vmatprep.subr.bf16.mxu0 0
      %343 = vmatpush1.bf16.msra.mxu0 0
      %344 = vmatprep.subr.bf16.mxu0 0
      %345 = vmatpush1.bf16.msra.mxu0 0
      %346 = vmatprep.subr.bf16.mxu0 0
      %347 = vmatpush1.bf16.msra.mxu0 0
      %348 = vmatprep.subr.bf16.mxu0 0
      %349 = vmatpush1.bf16.msra.mxu0 0
      %350 = vmatprep.subr.bf16.mxu0 0
      %351 = vmatpush1.bf16.msra.mxu0 0
      %352 = vmatprep.subr.bf16.mxu0 0
      %353 = vmatpush1.bf16.msra.mxu0 0
      %354 = vmatprep.subr.bf16.mxu0 0
      %355 = vmatpush1.bf16.msra.mxu0 0
      %356 = vmatprep.subr.bf16.mxu0 0
      %357 = vmatpush1.bf16.msra.mxu0 0
      %358 = vmatprep.subr.bf16.mxu0 0
      %359 = vmatpush1.bf16.msra.mxu0 0
      %360 = vmatprep.subr.bf16.mxu0 0
      %361 = vmatpush1.bf16.msra.mxu0 0
      %362 = vmatprep.subr.bf16.mxu0 0
      %363 = vmatpush1.bf16.msra.mxu0 0
      %364 = vmatprep.subr.bf16.mxu0 0
      %365 = vmatpush1.bf16.msra.mxu0 0
      %366 = vmatprep.subr.bf16.mxu0 0
      %367 = vmatpush1.bf16.msra.mxu0 0
      %368 = vmatprep.subr.bf16.mxu0 0
      %369 = vmatpush1.bf16.msra.mxu0 0
      %370 = vmatprep.mubr.bf16.mxu0 0
      %371 = vmatmul.mubr.bf16.gmra.mrb[0].mxu0 %v336
      %v372 = vpop.f32.mrb[0].mxu0
      %v373 = vadd.f32 0.0, %v372
      %v374 = vpop.f32.mrb[0].mxu0
      %v375 = vpop.f32.mrb[0].mxu0
      %v376 = vadd.f32 0.0, %v375
      %v377 = vpop.f32.mrb[0].mxu0
      %378 = vdwg.mxu0
      %v379 = vadd.f32 %v309, %v373
      %v380 = vadd.f32 %v310, %v376
      %381 = vst.msk [vmem:[#allocation2] sm:$0xff] %vm334, %v379
      %382 = vst.msk [vmem:[#allocation2 + $0x8] sm:$0xff] %vm334, %v380
      // Predicated region
      $region37: #{multi_head_attention.3} parent=31 // pred_check
        %p383 = pneg %p302
      $region38: #{multi_head_attention.3} parent=31 // pred_check_branch
        %385 = sbr.rel (%p383) target = $region40
      $region39: #{multi_head_attention.3} parent=31 // pred_region
        %v386 = vld [vmem:[#allocation2] sm:$0xff]
        %v387 = vld [vmem:[#allocation2 + $0x8] sm:$0xff]
        %v388 = vld [vmem:[%s287] sm:$0x1]
        %v390 = vlaneseq
        %v391 = vshrl.u32 %v390, 7
        %v392 = vsub.s32 0, %v391
        %v393 = vrot.slane %v388, %v392
        %v395 = vadd.f32 %v386, %v393
        %v396 = vadd.f32 %v387, %v393
        %v397 = vpack.c.bf16 %v396, %v395
        %v399 = vunpack.c.l.b16 %v397
        %v400 = vunpack.c.h.b16 %v397
        %v401 = vpack.c.b16 %v399, %v399
        %v402 = vpack.c.b16 %v400, %v400
        %vm405 = vcmask 257024
        %406 = vst.msk [vmem:[%s299] sm:$0xf] %vm405, %v401
        %407 = vst.msk [vmem:[%s299 + $0x4] sm:$0xf] %vm405, %v402
      $region40: #{multi_head_attention.3} parent=31 // pred_fallthru
        _
      %s408 = smul.u32 2, %s21
      %p409 = scmp.lt.s32.totalorder %s20, 2
      %s410 = scalar_select %p409, %s20, 2
      %p411 = scmp.lt.s32.totalorder %s408, 1
      %s412 = scalar_select %p411, %s408, 1
      %p413 = scmp.lt.s32.totalorder %s22, 0
      %s414 = scalar_select %p413, %s22, 0
      %s415 = sadd.s32 %s414, %s412
      %s416 = smul.addr %s410, 2
      %s417 = sadd.s32 %s415, %s416
      %s418 = smul.addr %s417, 4
      %s419 = scalar_lea.vmem %s3, %s418
      // Predicated region
      $region41: #{multi_head_attention.3} parent=31 // pred_check
        %p420 = pneg %p148
      $region42: #{multi_head_attention.3} parent=31 // pred_check_branch
        %422 = sbr.rel (%p420) target = $region44
      $region43: #{multi_head_attention.3} parent=31 // pred_region
        %s423 = smul.u32 2, %s21
      $region44: #{multi_head_attention.3} parent=31 // pred_fallthru
        _
    $region32: #{multi_head_attention.3} parent=5 // pred_fallthru
      _
    %p424 = scmp.le.s32.totalorder 2, %s9
    // Predicated region
    $region45: #{multi_head_attention.3} parent=5 // pred_check
      %p425 = pneg %p424
    $region46: #{multi_head_attention.3} parent=5 // pred_check_branch
      %427 = sbr.rel (%p425) target = $region48
    $region47: #{multi_head_attention.3} parent=5 // pred_region
      %s428 = ssub.s32 %s9, 2
      // Predicated region
      $region49: #{multi_head_attention.3} parent=47 // pred_check
        %p429 = pneg %p154
      $region50: #{multi_head_attention.3} parent=47 // pred_check_branch
        %431 = sbr.rel (%p429) target = $region52
      $region51: #{multi_head_attention.3} parent=47 // pred_region
        %s432 = smul.u32 2, %s25
        %p433 = scmp.lt.s32.totalorder %s24, 2
        %s434 = scalar_select %p433, %s24, 2
        %p435 = scmp.lt.s32.totalorder %s432, 1
        %s436 = scalar_select %p435, %s432, 1
        %p437 = scmp.lt.s32.totalorder %s26, 0
        %s438 = scalar_select %p437, %s26, 0
        %s439 = sadd.s32 %s438, %s436
        %s440 = smul.addr %s434, 2
        %s441 = sadd.s32 %s439, %s440
        %s442 = smul.addr %s441, 4
        %s443 = scalar_lea.vmem %s3, %s442
      $region52: #{multi_head_attention.3} parent=47 // pred_fallthru
        _
    $region48: #{multi_head_attention.3} parent=5 // pred_fallthru
      _
  $region6: #{multi_head_attention.3} parent=0 // loop_footer
    %s13 = sadd.s32 1, %s9
  $region7: #{multi_head_attention.3} parent=0 // loop_footer_branch
    %8 = sbr.rel target = $region3
  $region8: #{multi_head_attention.3} parent=0 // loop_exit
    _

// kernel: multi_head_attention.4
$region0: #{multi_head_attention.4}
  #allocation0 [shape = 'u32[]', space=smem, size = 0x4, offset = 0x4, fixed_abs, tag = 'smem constant byte address 0x4 - core index']
  #allocation1 [shape = 'u32[144,128]{1,0:T(1,128)}', space=vmem, size = 0x12000, scoped, tag = 'internal scratch']
  #allocation2 [shape = 'bf16[4,8,8]{2,1,0:T(8,128)(2,1)}', space=vmem, size = 0x2000, scoped, tag = 'scratch operand']
  #allocation3 [shape = 'f32[4,8,1]{2,1,0:T(8,128)}', space=vmem, size = 0x4000, scoped, tag = 'scratch operand']
  #allocation4 [shape = 'f32[4,8,1]{2,1,0:T(8,128)}', space=vmem, size = 0x4000, scoped, tag = 'scratch operand']
  #allocation5 [shape = 'f32[4,8,8]{2,1,0:T(8,128)}', space=vmem, size = 0x4000, scoped, tag = 'scratch operand']
  %s0 = inlined_call_operand.vmem [shape: bf16[3,2,8,32], index: 0, kind: input, shape index: {}, may-alias: {0,1,2}]
  %s1 = inlined_call_operand.vmem [shape: bf16[3,2,8,32], index: 1, kind: input, shape index: {}, may-alias: {0,1,2}]
  %s2 = inlined_call_operand.vmem [shape: bf16[3,2,8,32], index: 2, kind: input, shape index: {}, may-alias: {0,1,2}]
  %s3 = inlined_call_operand.vmem [shape: bf16[2,8,32], index: 3, kind: output, shape index: {}]
  %s4 = sld [smem:[#allocation0]]
  $region53: #{multi_head_attention.4} parent=0
    _
  %s6 = ssub.s32 1, %s4
  %s7 = scalar_select 0, %s6, %s4
  loop: start=0, step=1, limit=4
  $region2: #{multi_head_attention.4} parent=0 // loop_pre_header
    _
  $region3: #{multi_head_attention.4} parent=0 // loop_header
    %s9 = sphi 0, %s13
    %p10 = scmp.ge.s32.totalorder %s9, 4
    %s16 = sphi 0, %s35
    %s17 = sphi 0, %s31
    %s18 = sphi 0, %s27
    %s19 = sphi 0, %s16
    %s20 = sphi 0, %s17
    %s21 = sphi 0, %s18
    %s22 = sphi 0, %s19
    %s23 = sphi 0, %s20
    %s24 = sphi 0, %s21
    %s40 = sphi 0, %s42
    %s43 = sphi 0, %s40
    %s44 = sphi 0, %s43
    %s60 = sphi 0, %s44
    %s68 = sphi 0, %s70
    %s71 = sphi 0, %s68
    %s72 = sphi 0, %s71
    %s88 = sphi 0, %s72
    %s96 = sphi 0, %s98
    %s99 = sphi 0, %s96
    %s100 = sphi 0, %s99
    %s116 = sphi 0, %s100
    %s124 = sphi 0, %s126
    %s127 = sphi 0, %s124
    %s128 = sphi 0, %s127
    %s144 = sphi 0, %s128
  $region4: #{multi_head_attention.4} parent=0 // loop_header_branch
    %12 = sbr.rel (%p10) target = $region8
  $region5: #{multi_head_attention.4} parent=0 // loop_body
    %s14 = ssub.s32 %s9, 1
    %s15 = ssub.s32 %s9, 2
    %s25 = sadd.s32 1, %s18
    %p26 = scmp.ge.s32.totalorder %s25, 1
    %s27 = scalar_select %p26, 0, %s25
    %s28 = sadd.s32 1, %s17
    %s29 = scalar_select %p26, %s28, %s17
    %p30 = scmp.ge.s32.totalorder %s29, 1
    %s31 = scalar_select %p30, 0, %s29
    %s32 = sadd.s32 1, %s16
    %s33 = scalar_select %p30, %s32, %s16
    %p34 = scmp.ge.s32.totalorder %s33, 2
    %s35 = scalar_select %p34, 0, %s33
    %s36 = ssub.s32 %s16, %s35
    %s37 = ssub.s32 %s17, %s31
    %s38 = sor.u32 %s36, %s37
    %p39 = scmp.eq.s32.totalorder %s38, 0
    %s41 = sadd.s32 %s40, 1
    %s42 = scalar_select %p39, %s40, %s41
    %p45 = pneg %p39
    %p46 = scmp.eq.s32.totalorder %s9, 1
    %p47 = por %p45, %p46
    %p48 = scmp.ne.s32.totalorder %s40, %s43
    %p49 = scmp.eq.s32.totalorder %s9, 0
    %p50 = por %p48, %p49
    %p51 = scmp.ne.s32.totalorder %s40, %s43
    %p52 = scmp.eq.s32.totalorder %s14, 1
    %p53 = por %p51, %p52
    %p54 = scmp.ne.s32.totalorder %s43, %s44
    %p55 = scmp.eq.s32.totalorder %s14, 0
    %p56 = por %p54, %p55
    %p57 = scmp.ne.s32.totalorder %s43, %s44
    %p58 = scmp.eq.s32.totalorder %s15, 1
    %p59 = por %p57, %p58
    %p61 = scmp.ne.s32.totalorder %s44, %s60
    %p62 = scmp.eq.s32.totalorder %s15, 0
    %p63 = por %p61, %p62
    %s64 = ssub.s32 %s16, %s35
    %s65 = ssub.s32 %s18, %s27
    %s66 = sor.u32 %s64, %s65
    %p67 = scmp.eq.s32.totalorder %s66, 0
    %s69 = sadd.s32 %s68, 1
    %s70 = scalar_select %p67, %s68, %s69
    %p73 = pneg %p67
    %p74 = scmp.eq.s32.totalorder %s9, 1
    %p75 = por %p73, %p74
    %p76 = scmp.ne.s32.totalorder %s68, %s71
    %p77 = scmp.eq.s32.totalorder %s9, 0
    %p78 = por %p76, %p77
    %p79 = scmp.ne.s32.totalorder %s68, %s71
    %p80 = scmp.eq.s32.totalorder %s14, 1
    %p81 = por %p79, %p80
    %p82 = scmp.ne.s32.totalorder %s71, %s72
    %p83 = scmp.eq.s32.totalorder %s14, 0
    %p84 = por %p82, %p83
    %p85 = scmp.ne.s32.totalorder %s71, %s72
    %p86 = scmp.eq.s32.totalorder %s15, 1
    %p87 = por %p85, %p86
    %p89 = scmp.ne.s32.totalorder %s72, %s88
    %p90 = scmp.eq.s32.totalorder %s15, 0
    %p91 = por %p89, %p90
    %s92 = ssub.s32 %s16, %s35
    %s93 = ssub.s32 %s18, %s27
    %s94 = sor.u32 %s92, %s93
    %p95 = scmp.eq.s32.totalorder %s94, 0
    %s97 = sadd.s32 %s96, 1
    %s98 = scalar_select %p95, %s96, %s97
    %p101 = pneg %p95
    %p102 = scmp.eq.s32.totalorder %s9, 1
    %p103 = por %p101, %p102
    %p104 = scmp.ne.s32.totalorder %s96, %s99
    %p105 = scmp.eq.s32.totalorder %s9, 0
    %p106 = por %p104, %p105
    %p107 = scmp.ne.s32.totalorder %s96, %s99
    %p108 = scmp.eq.s32.totalorder %s14, 1
    %p109 = por %p107, %p108
    %p110 = scmp.ne.s32.totalorder %s99, %s100
    %p111 = scmp.eq.s32.totalorder %s14, 0
    %p112 = por %p110, %p111
    %p113 = scmp.ne.s32.totalorder %s99, %s100
    %p114 = scmp.eq.s32.totalorder %s15, 1
    %p115 = por %p113, %p114
    %p117 = scmp.ne.s32.totalorder %s100, %s116
    %p118 = scmp.eq.s32.totalorder %s15, 0
    %p119 = por %p117, %p118
    %s120 = ssub.s32 %s16, %s35
    %s121 = ssub.s32 %s17, %s31
    %s122 = sor.u32 %s120, %s121
    %p123 = scmp.eq.s32.totalorder %s122, 0
    %s125 = sadd.s32 %s124, 1
    %s126 = scalar_select %p123, %s124, %s125
    %p129 = pneg %p123
    %p130 = scmp.eq.s32.totalorder %s9, 1
    %p131 = por %p129, %p130
    %p132 = scmp.ne.s32.totalorder %s124, %s127
    %p133 = scmp.eq.s32.totalorder %s9, 0
    %p134 = por %p132, %p133
    %p135 = scmp.ne.s32.totalorder %s124, %s127
    %p136 = scmp.eq.s32.totalorder %s14, 1
    %p137 = por %p135, %p136
    %p138 = scmp.ne.s32.totalorder %s127, %s128
    %p139 = scmp.eq.s32.totalorder %s14, 0
    %p140 = por %p138, %p139
    %p141 = scmp.ne.s32.totalorder %s127, %s128
    %p142 = scmp.eq.s32.totalorder %s15, 1
    %p143 = por %p141, %p142
    %p145 = scmp.ne.s32.totalorder %s128, %s144
    %p146 = scmp.eq.s32.totalorder %s15, 0
    %p147 = por %p145, %p146
    %p148 = scmp.le.s32.totalorder 1, %s9
    %p149 = scmp.lt.s32.totalorder %s9, 3
    %p150 = pnand %p148, %p149
    %p151 = pneg %p150
    // Predicated region
    $region9: #{multi_head_attention.4} parent=5 // pred_check
      _
    $region10: #{multi_head_attention.4} parent=5 // pred_check_branch
      %153 = sbr.rel (%p150) target = $region12
    $region11: #{multi_head_attention.4} parent=5 // pred_region
      %s154 = ssub.s32 %s9, 1
    $region12: #{multi_head_attention.4} parent=5 // pred_fallthru
      _
    %p155 = scmp.lt.s32.totalorder %s9, 2
    // Predicated region
    $region13: #{multi_head_attention.4} parent=5 // pred_check
      %p156 = pneg %p155
    $region14: #{multi_head_attention.4} parent=5 // pred_check_branch
      %158 = sbr.rel (%p156) target = $region16
    $region15: #{multi_head_attention.4} parent=5 // pred_region
      // Predicated region
      $region17: #{multi_head_attention.4} parent=15 // pred_check
        %p159 = pneg %p50
      $region18: #{multi_head_attention.4} parent=15 // pred_check_branch
        %161 = sbr.rel (%p159) target = $region20
      $region19: #{multi_head_attention.4} parent=15 // pred_region
        %p162 = scmp.lt.s32.totalorder %s16, 1
        %s163 = scalar_select %p162, %s16, 1
        %p164 = scmp.lt.s32.totalorder %s17, 0
        %s165 = scalar_select %p164, %s17, 0
        %s166 = sadd.s32 %s165, %s163
        %s167 = smul.addr %s166, 4
        %s168 = scalar_lea.vmem %s0, %s167
      $region20: #{multi_head_attention.4} parent=15 // pred_fallthru
        _
      // Predicated region
      $region21: #{multi_head_attention.4} parent=15 // pred_check
        %p169 = pneg %p78
      $region22: #{multi_head_attention.4} parent=15 // pred_check_branch
        %171 = sbr.rel (%p169) target = $region24
      $region23: #{multi_head_attention.4} parent=15 // pred_region
        %p172 = scmp.lt.s32.totalorder %s16, 1
        %s173 = scalar_select %p172, %s16, 1
        %p174 = scmp.lt.s32.totalorder %s18, 0
        %s175 = scalar_select %p174, %s18, 0
        %s176 = sadd.s32 %s175, %s173
        %s177 = sadd.s32 %s176, 2
        %s178 = smul.addr %s177, 4
        %s179 = scalar_lea.vmem %s1, %s178
      $region24: #{multi_head_attention.4} parent=15 // pred_fallthru
        _
      // Predicated region
      $region25: #{multi_head_attention.4} parent=15 // pred_check
        %p180 = pneg %p106
      $region26: #{multi_head_attention.4} parent=15 // pred_check_branch
        %182 = sbr.rel (%p180) target = $region28
      $region27: #{multi_head_attention.4} parent=15 // pred_region
        %p183 = scmp.lt.s32.totalorder %s16, 1
        %s184 = scalar_select %p183, %s16, 1
        %p185 = scmp.lt.s32.totalorder %s18, 0
        %s186 = scalar_select %p185, %s18, 0
        %s187 = sadd.s32 %s186, %s184
        %s188 = sadd.s32 %s187, 4
        %s189 = smul.addr %s188, 4
        %s190 = scalar_lea.vmem %s2, %s189
      $region28: #{multi_head_attention.4} parent=15 // pred_fallthru
        _
    $region16: #{multi_head_attention.4} parent=5 // pred_fallthru
      _
    %p191 = scmp.le.s32.totalorder 1, %s9
    %p192 = scmp.lt.s32.totalorder %s9, 3
    %p193 = pnand %p191, %p192
    %p194 = pneg %p193
    // Predicated region
    $region29: #{multi_head_attention.4} parent=5 // pred_check
      _
    $region30: #{multi_head_attention.4} parent=5 // pred_check_branch
      %196 = sbr.rel (%p193) target = $region32
    $region31: #{multi_head_attention.4} parent=5 // pred_region
      %s197 = ssub.s32 %s9, 1
      %p198 = scmp.lt.s32.totalorder %s19, 1
      %s199 = scalar_select %p198, %s19, 1
      %p200 = scmp.lt.s32.totalorder %s20, 0
      %s201 = scalar_select %p200, %s20, 0
      %s202 = sadd.s32 %s201, %s199
      %s203 = smul.addr %s202, 4
      %s204 = scalar_lea.vmem %s0, %s203
      %p205 = pneg %p56
      %p206 = pneg %p53
      %p207 = scmp.lt.s32.totalorder %s19, 1
      %s208 = scalar_select %p207, %s19, 1
      %p209 = scmp.lt.s32.totalorder %s21, 0
      %s210 = scalar_select %p209, %s21, 0
      %s211 = sadd.s32 %s210, %s208
      %s212 = sadd.s32 %s211, 2
      %s213 = smul.addr %s212, 4
      %s214 = scalar_lea.vmem %s1, %s213
      %p215 = pneg %p84
      %p216 = pneg %p81
      %p217 = scmp.lt.s32.totalorder %s19, 1
      %s218 = scalar_select %p217, %s19, 1
      %p219 = scmp.lt.s32.totalorder %s21, 0
      %s220 = scalar_select %p219, %s21, 0
      %s221 = sadd.s32 %s220, %s218
      %s222 = sadd.s32 %s221, 4
      %s223 = smul.addr %s222, 4
      %s224 = scalar_lea.vmem %s2, %s223
      %p225 = pneg %p112
      %p226 = pneg %p109
      %p227 = pneg %p140
      %p228 = pneg %p137
      %p229 = scmp.lt.s32.totalorder %s19, 1
      %s230 = scalar_select %p229, %s19, 1
      %p231 = scmp.lt.s32.totalorder %s20, 0
      %s232 = scalar_select %p231, %s20, 0
      %s233 = sadd.s32 %s232, %s230
      %s234 = smul.addr %s233, 4
      %s235 = scalar_lea.vmem %s3, %s234
      %p236 = scmp.lt.s32.totalorder %s19, 1
      %s237 = scalar_select %p236, %s19, 1
      %p238 = scmp.lt.s32.totalorder %s20, 0
      %s239 = scalar_select %p238, %s20, 0
      %s240 = sadd.s32 %s239, %s237
      %s241 = smul.addr %s240, 4
      %s242 = scalar_lea.vmem %s0, %s241
      %p243 = scmp.lt.s32.totalorder %s19, 1
      %s244 = scalar_select %p243, %s19, 1
      %p245 = scmp.lt.s32.totalorder %s21, 0
      %s246 = scalar_select %p245, %s21, 0
      %s247 = sadd.s32 %s246, %s244
      %s248 = sadd.s32 %s247, 2
      %s249 = smul.addr %s248, 4
      %s250 = scalar_lea.vmem %s1, %s249
      %p251 = scmp.lt.s32.totalorder %s19, 1
      %s252 = scalar_select %p251, %s19, 1
      %p253 = scmp.lt.s32.totalorder %s21, 0
      %s254 = scalar_select %p253, %s21, 0
      %s255 = sadd.s32 %s254, %s252
      %s256 = sadd.s32 %s255, 4
      %s257 = smul.addr %s256, 4
      %s258 = scalar_lea.vmem %s2, %s257
      %p259 = scmp.lt.s32.totalorder %s19, 1
      %s260 = scalar_select %p259, %s19, 1
      %p261 = scmp.lt.s32.totalorder %s20, 0
      %s262 = scalar_select %p261, %s20, 0
      %s263 = sadd.s32 %s262, %s260
      %s264 = smul.addr %s263, 4
      %s265 = scalar_lea.vmem %s3, %s264
      %p267 = scmp.eq.s32.totalorder %s21, 0
      // Predicated region
      $region33: #{multi_head_attention.4} parent=31 // pred_check
        %p268 = pneg %p267
      $region34: #{multi_head_attention.4} parent=31 // pred_check_branch
        %270 = sbr.rel (%p268) target = $region36
      $region35: #{multi_head_attention.4} parent=31 // pred_region
        %vm271 = vcmask 7168
        %272 = vst.msk [vmem:[#allocation3] sm:$0xff] %vm271, -inf
        %273 = vst.msk [vmem:[#allocation3 + $0x8] sm:$0xff] %vm271, -inf
        %274 = vst.msk [vmem:[#allocation3 + $0x10] sm:$0xff] %vm271, -inf
        %275 = vst.msk [vmem:[#allocation3 + $0x18] sm:$0xff] %vm271, -inf
        %276 = vst.msk [vmem:[#allocation4] sm:$0xff] %vm271, 0.0
        %277 = vst.msk [vmem:[#allocation4 + $0x8] sm:$0xff] %vm271, 0.0
        %278 = vst.msk [vmem:[#allocation4 + $0x10] sm:$0xff] %vm271, 0.0
        %279 = vst.msk [vmem:[#allocation4 + $0x18] sm:$0xff] %vm271, 0.0
        %vm280 = vcmask 64512
        %281 = vst.msk [vmem:[#allocation5] sm:$0xff] %vm280, 0.0
        %282 = vst.msk [vmem:[#allocation5 + $0x8] sm:$0xff] %vm280, 0.0
        %283 = vst.msk [vmem:[#allocation5 + $0x10] sm:$0xff] %vm280, 0.0
        %284 = vst.msk [vmem:[#allocation5 + $0x18] sm:$0xff] %vm280, 0.0
        %v285 = vld [vmem:[%s242] sm:$0xf]
        %vm286 = vcmask 60416
        %287 = vst.msk [vmem:[#allocation2] sm:$0xf] %vm286, %v285
        %289 = vrot.lane.b32.xlu0 %v285, 120
        %v290 = vpop.permute.xlu0 %289
        %s292 = scalar_lea.vmem [#allocation2], 4
        %293 = vst.msk [vmem:[%s292] sm:$0xf] %vm286, %v290
        %294 = vrot.lane.b32.xlu0 %v285, 112
        %v295 = vpop.permute.xlu0 %294
        %s297 = scalar_lea.vmem [#allocation2], 8
        %298 = vst.msk [vmem:[%s297] sm:$0xf] %vm286, %v295
        %299 = vrot.lane.b32.xlu0 %v285, 104
        %v300 = vpop.permute.xlu0 %299
        %s302 = scalar_lea.vmem [#allocation2], 12
        %303 = vst.msk [vmem:[%s302] sm:$0xf] %vm286, %v300
      $region36: #{multi_head_attention.4} parent=31 // pred_fallthru
        _
      %v304 = vld [vmem:[%s250] sm:$0xf]
      %v305 = vld [vmem:[%s258] sm:$0xf]
      %307 = vrot.lane.b32.xlu0 %v304, 120
      %v308 = vpop.permute.xlu0 %307
      %309 = vrot.lane.b32.xlu0 %v304, 112
      %v310 = vpop.permute.xlu0 %309
      %311 = vrot.lane.b32.xlu0 %v304, 104
      %v312 = vpop.permute.xlu0 %311
      %314 = vrot.lane.b32.xlu0 %v305, 120
      %v315 = vpop.permute.xlu0 %314
      %316 = vrot.lane.b32.xlu0 %v305, 112
      %v317 = vpop.permute.xlu0 %316
      %318 = vrot.lane.b32.xlu0 %v305, 104
      %v319 = vpop.permute.xlu0 %318
      %v320 = vld [vmem:[#allocation2] sm:$0xf]
      %v321 = vld [vmem:[#allocation2 + $0x4] sm:$0xf]
      %v322 = vld [vmem:[#allocation2 + $0x8] sm:$0xf]
      %v323 = vld [vmem:[#allocation2 + $0xc] sm:$0xf]
      %vm324 = vcmask 64512
      %v326 = vsel %vm324, %v320, 0
      %v329 = vsel %vm324, %v304, 0
      %331 = vmatprep.subr.bf16.mxu0 0
      %332 = vmatpush1.bf16.xpose.msra.mxu0 %v329
      %333 = vmatprep.subr.bf16.mxu0 0
      %334 = vmatpush1.bf16.xpose.msra.mxu0 0
      %335 = vmatprep.subr.bf16.mxu0 0
      %336 = vmatpush1.bf16.xpose.msra.mxu0 0
      %337 = vmatprep.subr.bf16.mxu0 0
      %338 = vmatpush1.bf16.xpose.msra.mxu0 0
      %339 = vmatprep.subr.bf16.mxu0 0
      %340 = vmatpush1.bf16.xpose.msra.mxu0 0
      %341 = vmatprep.subr.bf16.mxu0 0
      %342 = vmatpush1.bf16.xpose.msra.mxu0 0
      %343 = vmatprep.subr.bf16.mxu0 0
      %344 = vmatpush1.bf16.xpose.msra.mxu0 0
      %345 = vmatprep.subr.bf16.mxu0 0
      %346 = vmatpush1.bf16.xpose.msra.mxu0 0
      %347 = vmatprep.subr.bf16.mxu0 0
      %348 = vmatpush1.bf16.xpose.msra.mxu0 0
      %349 = vmatprep.subr.bf16.mxu0 0
      %350 = vmatpush1.bf16.xpose.msra.mxu0 0
      %351 = vmatprep.subr.bf16.mxu0 0
      %352 = vmatpush1.bf16.xpose.msra.mxu0 0
      %353 = vmatprep.subr.bf16.mxu0 0
      %354 = vmatpush1.bf16.xpose.msra.mxu0 0
      %355 = vmatprep.subr.bf16.mxu0 0
      %356 = vmatpush1.bf16.xpose.msra.mxu0 0
      %357 = vmatprep.subr.bf16.mxu0 0
      %358 = vmatpush1.bf16.xpose.msra.mxu0 0
      %359 = vmatprep.subr.bf16.mxu0 0
      %360 = vmatpush1.bf16.xpose.msra.mxu0 0
      %361 = vmatprep.subr.bf16.mxu0 0
      %362 = vmatpush1.bf16.xpose.msra.mxu0 0
      %363 = vmatprep.mubr.bf16.mxu0 0
      %364 = vmatmul.mubr.bf16.gmra.mrb[0].mxu0 %v326
      %v365 = vpop.f32.mrb[0].mxu0
      %v366 = vadd.f32 0.0, %v365
      %v367 = vpop.f32.mrb[0].mxu0
      %v368 = vpop.f32.mrb[0].mxu0
      %v369 = vpop.f32.mrb[0].mxu0
      %370 = vdwg.mxu0
      %v372 = vsel %vm324, %v321, 0
      %v375 = vsel %vm324, %v308, 0
      %377 = vmatprep.subr.bf16.mxu0 0
      %378 = vmatpush1.bf16.xpose.msra.mxu0 %v375
      %379 = vmatprep.subr.bf16.mxu0 0
      %380 = vmatpush1.bf16.xpose.msra.mxu0 0
      %381 = vmatprep.subr.bf16.mxu0 0
      %382 = vmatpush1.bf16.xpose.msra.mxu0 0
      %383 = vmatprep.subr.bf16.mxu0 0
      %384 = vmatpush1.bf16.xpose.msra.mxu0 0
      %385 = vmatprep.subr.bf16.mxu0 0
      %386 = vmatpush1.bf16.xpose.msra.mxu0 0
      %387 = vmatprep.subr.bf16.mxu0 0
      %388 = vmatpush1.bf16.xpose.msra.mxu0 0
      %389 = vmatprep.subr.bf16.mxu0 0
      %390 = vmatpush1.bf16.xpose.msra.mxu0 0
      %391 = vmatprep.subr.bf16.mxu0 0
      %392 = vmatpush1.bf16.xpose.msra.mxu0 0
      %393 = vmatprep.subr.bf16.mxu0 0
      %394 = vmatpush1.bf16.xpose.msra.mxu0 0
      %395 = vmatprep.subr.bf16.mxu0 0
      %396 = vmatpush1.bf16.xpose.msra.mxu0 0
      %397 = vmatprep.subr.bf16.mxu0 0
      %398 = vmatpush1.bf16.xpose.msra.mxu0 0
      %399 = vmatprep.subr.bf16.mxu0 0
      %400 = vmatpush1.bf16.xpose.msra.mxu0 0
      %401 = vmatprep.subr.bf16.mxu0 0
      %402 = vmatpush1.bf16.xpose.msra.mxu0 0
      %403 = vmatprep.subr.bf16.mxu0 0
      %404 = vmatpush1.bf16.xpose.msra.mxu0 0
      %405 = vmatprep.subr.bf16.mxu0 0
      %406 = vmatpush1.bf16.xpose.msra.mxu0 0
      %407 = vmatprep.subr.bf16.mxu0 0
      %408 = vmatpush1.bf16.xpose.msra.mxu0 0
      %409 = vmatprep.mubr.bf16.mxu0 0
      %410 = vmatmul.mubr.bf16.gmra.mrb[0].mxu0 %v372
      %v411 = vpop.f32.mrb[0].mxu0
      %v412 = vadd.f32 0.0, %v411
      %v413 = vpop.f32.mrb[0].mxu0
      %v414 = vpop.f32.mrb[0].mxu0
      %v415 = vpop.f32.mrb[0].mxu0
      %416 = vdwg.mxu0
      %v418 = vsel %vm324, %v322, 0
      %v421 = vsel %vm324, %v310, 0
      %423 = vmatprep.subr.bf16.mxu0 0
      %424 = vmatpush1.bf16.xpose.msra.mxu0 %v421
      %425 = vmatprep.subr.bf16.mxu0 0
      %426 = vmatpush1.bf16.xpose.msra.mxu0 0
      %427 = vmatprep.subr.bf16.mxu0 0
      %428 = vmatpush1.bf16.xpose.msra.mxu0 0
      %429 = vmatprep.subr.bf16.mxu0 0
      %430 = vmatpush1.bf16.xpose.msra.mxu0 0
      %431 = vmatprep.subr.bf16.mxu0 0
      %432 = vmatpush1.bf16.xpose.msra.mxu0 0
      %433 = vmatprep.subr.bf16.mxu0 0
      %434 = vmatpush1.bf16.xpose.msra.mxu0 0
      %435 = vmatprep.subr.bf16.mxu0 0
      %436 = vmatpush1.bf16.xpose.msra.mxu0 0
      %437 = vmatprep.subr.bf16.mxu0 0
      %438 = vmatpush1.bf16.xpose.msra.mxu0 0
      %439 = vmatprep.subr.bf16.mxu0 0
      %440 = vmatpush1.bf16.xpose.msra.mxu0 0
      %441 = vmatprep.subr.bf16.mxu0 0
      %442 = vmatpush1.bf16.xpose.msra.mxu0 0
      %443 = vmatprep.subr.bf16.mxu0 0
      %444 = vmatpush1.bf16.xpose.msra.mxu0 0
      %445 = vmatprep.subr.bf16.mxu0 0
      %446 = vmatpush1.bf16.xpose.msra.mxu0 0
      %447 = vmatprep.subr.bf16.mxu0 0
      %448 = vmatpush1.bf16.xpose.msra.mxu0 0
      %449 = vmatprep.subr.bf16.mxu0 0
      %450 = vmatpush1.bf16.xpose.msra.mxu0 0
      %451 = vmatprep.subr.bf16.mxu0 0
      %452 = vmatpush1.bf16.xpose.msra.mxu0 0
      %453 = vmatprep.subr.bf16.mxu0 0
      %454 = vmatpush1.bf16.xpose.msra.mxu0 0
      %455 = vmatprep.mubr.bf16.mxu0 0
      %456 = vmatmul.mubr.bf16.gmra.mrb[0].mxu0 %v418
      %v457 = vpop.f32.mrb[0].mxu0
      %v458 = vadd.f32 0.0, %v457
      %v459 = vpop.f32.mrb[0].mxu0
      %v460 = vpop.f32.mrb[0].mxu0
      %v461 = vpop.f32.mrb[0].mxu0
      %462 = vdwg.mxu0
      %v464 = vsel %vm324, %v323, 0
      %v467 = vsel %vm324, %v312, 0
      %469 = vmatprep.subr.bf16.mxu0 0
      %470 = vmatpush1.bf16.xpose.msra.mxu0 %v467
      %471 = vmatprep.subr.bf16.mxu0 0
      %472 = vmatpush1.bf16.xpose.msra.mxu0 0
      %473 = vmatprep.subr.bf16.mxu0 0
      %474 = vmatpush1.bf16.xpose.msra.mxu0 0
      %475 = vmatprep.subr.bf16.mxu0 0
      %476 = vmatpush1.bf16.xpose.msra.mxu0 0
      %477 = vmatprep.subr.bf16.mxu0 0
      %478 = vmatpush1.bf16.xpose.msra.mxu0 0
      %479 = vmatprep.subr.bf16.mxu0 0
      %480 = vmatpush1.bf16.xpose.msra.mxu0 0
      %481 = vmatprep.subr.bf16.mxu0 0
      %482 = vmatpush1.bf16.xpose.msra.mxu0 0
      %483 = vmatprep.subr.bf16.mxu0 0
      %484 = vmatpush1.bf16.xpose.msra.mxu0 0
      %485 = vmatprep.subr.bf16.mxu0 0
      %486 = vmatpush1.bf16.xpose.msra.mxu0 0
      %487 = vmatprep.subr.bf16.mxu0 0
      %488 = vmatpush1.bf16.xpose.msra.mxu0 0
      %489 = vmatprep.subr.bf16.mxu0 0
      %490 = vmatpush1.bf16.xpose.msra.mxu0 0
      %491 = vmatprep.subr.bf16.mxu0 0
      %492 = vmatpush1.bf16.xpose.msra.mxu0 0
      %493 = vmatprep.subr.bf16.mxu0 0
      %494 = vmatpush1.bf16.xpose.msra.mxu0 0
      %495 = vmatprep.subr.bf16.mxu0 0
      %496 = vmatpush1.bf16.xpose.msra.mxu0 0
      %497 = vmatprep.subr.bf16.mxu0 0
      %498 = vmatpush1.bf16.xpose.msra.mxu0 0
      %499 = vmatprep.subr.bf16.mxu0 0
      %500 = vmatpush1.bf16.xpose.msra.mxu0 0
      %501 = vmatprep.mubr.bf16.mxu0 0
      %502 = vmatmul.mubr.bf16.gmra.mrb[0].mxu0 %v464
      %v503 = vpop.f32.mrb[0].mxu0
      %v504 = vadd.f32 0.0, %v503
      %v505 = vpop.f32.mrb[0].mxu0
      %v506 = vpop.f32.mrb[0].mxu0
      %v507 = vpop.f32.mrb[0].mxu0
      %508 = vdwg.mxu0
      %v509 = vld [vmem:[#allocation3] sm:$0xff]
      %v510 = vld [vmem:[#allocation3 + $0x8] sm:$0xff]
      %v511 = vld [vmem:[#allocation3 + $0x10] sm:$0xff]
      %v512 = vld [vmem:[#allocation3 + $0x18] sm:$0xff]
      %v513 = vsel %vm324, %v366, -inf
      %514 = vmax.xlane.f32.xlu0 %v513
      %v515 = vpop.xlane.xlu0 %514
      %v516 = vsel %vm324, %v412, -inf
      %517 = vmax.xlane.f32.xlu0 %v516
      %v518 = vpop.xlane.xlu0 %517
      %v519 = vsel %vm324, %v458, -inf
      %520 = vmax.xlane.f32.xlu0 %v519
      %v521 = vpop.xlane.xlu0 %520
      %v522 = vsel %vm324, %v504, -inf
      %523 = vmax.xlane.f32.xlu0 %v522
      %v524 = vpop.xlane.xlu0 %523
      %v525 = vmax.f32 %v509, %v515
      %v526 = vmax.f32 %v510, %v518
      %v527 = vmax.f32 %v511, %v521
      %v528 = vmax.f32 %v512, %v524
      %v529 = vsub.f32 %v509, %v525
      %v530 = vsub.f32 %v510, %v526
      %v531 = vsub.f32 %v511, %v527
      %v532 = vsub.f32 %v512, %v528
      %v533 = vmul.f32 %v529, 1.442695
      %v534 = vpow.pop %v533
      %v535 = vmul.f32 %v530, 1.442695
      %v536 = vpow.pop %v535
      %v537 = vmul.f32 %v531, 1.442695
      %v538 = vpow.pop %v537
      %v539 = vmul.f32 %v532, 1.442695
      %v540 = vpow.pop %v539
      %542 = vset.pattern.permute.xlu0 0
      %543 = vperm.xlu0 %542, %v525
      %v544 = vpop.permute.xlu0 %543
      %547 = vset.pattern.permute.xlu0 0
      %548 = vperm.xlu0 %547, %v526
      %v549 = vpop.permute.xlu0 %548
      %552 = vset.pattern.permute.xlu0 0
      %553 = vperm.xlu0 %552, %v527
      %v554 = vpop.permute.xlu0 %553
      %557 = vset.pattern.permute.xlu0 0
      %558 = vperm.xlu0 %557, %v528
      %v559 = vpop.permute.xlu0 %558
      %v561 = vsub.f32 %v366, %v544
      %v562 = vsub.f32 %v412, %v549
      %v563 = vsub.f32 %v458, %v554
      %v564 = vsub.f32 %v504, %v559
      %v565 = vmul.f32 %v561, 1.442695
      %v566 = vpow.pop %v565
      %v567 = vmul.f32 %v562, 1.442695
      %v568 = vpow.pop %v567
      %v569 = vmul.f32 %v563, 1.442695
      %v570 = vpow.pop %v569
      %v571 = vmul.f32 %v564, 1.442695
      %v572 = vpow.pop %v571
      %v573 = vld [vmem:[#allocation4] sm:$0xff]
      %v574 = vld [vmem:[#allocation4 + $0x8] sm:$0xff]
      %v575 = vld [vmem:[#allocation4 + $0x10] sm:$0xff]
      %v576 = vld [vmem:[#allocation4 + $0x18] sm:$0xff]
      %v577 = vmul.f32 %v534, %v573
      %v578 = vmul.f32 %v536, %v574
      %v579 = vmul.f32 %v538, %v575
      %v580 = vmul.f32 %v540, %v576
      %v581 = vsel %vm324, %v566, 0.0
      %582 = vadd.xlane.f32.xlu0 %v581
      %v583 = vpop.xlane.xlu0 %582
      %v584 = vsel %vm324, %v568, 0.0
      %585 = vadd.xlane.f32.xlu0 %v584
      %v586 = vpop.xlane.xlu0 %585
      %v587 = vsel %vm324, %v570, 0.0
      %588 = vadd.xlane.f32.xlu0 %v587
      %v589 = vpop.xlane.xlu0 %588
      %v590 = vsel %vm324, %v572, 0.0
      %591 = vadd.xlane.f32.xlu0 %v590
      %v592 = vpop.xlane.xlu0 %591
      %v593 = vadd.f32 %v577, %v583
      %v594 = vadd.f32 %v578, %v586
      %v595 = vadd.f32 %v579, %v589
      %v596 = vadd.f32 %v580, %v592
      %vm597 = vcmask 7168
      %598 = vst.msk [vmem:[#allocation4] sm:$0xff] %vm597, %v593
      %599 = vst.msk [vmem:[#allocation4 + $0x8] sm:$0xff] %vm597, %v594
      %600 = vst.msk [vmem:[#allocation4 + $0x10] sm:$0xff] %vm597, %v595
      %601 = vst.msk [vmem:[#allocation4 + $0x18] sm:$0xff] %vm597, %v596
      %v602 = vld [vmem:[#allocation5] sm:$0xff]
      %v603 = vld [vmem:[#allocation5 + $0x8] sm:$0xff]
      %v604 = vld [vmem:[#allocation5 + $0x10] sm:$0xff]
      %v605 = vld [vmem:[#allocation5 + $0x18] sm:$0xff]
      %607 = vset.pattern.permute.xlu0 0
      %608 = vperm.xlu0 %607, %v534
      %v609 = vpop.permute.xlu0 %608
      %612 = vset.pattern.permute.xlu0 0
      %613 = vperm.xlu0 %612, %v536
      %v614 = vpop.permute.xlu0 %613
      %617 = vset.pattern.permute.xlu0 0
      %618 = vperm.xlu0 %617, %v538
      %v619 = vpop.permute.xlu0 %618
      %622 = vset.pattern.permute.xlu0 0
      %623 = vperm.xlu0 %622, %v540
      %v624 = vpop.permute.xlu0 %623
      %v626 = vmul.f32 %v609, %v602
      %v627 = vmul.f32 %v614, %v603
      %v628 = vmul.f32 %v619, %v604
      %v629 = vmul.f32 %v624, %v605
      %v630 = vpack.c.bf16 %v566, %v566
      %v631 = vpack.c.bf16 %v568, %v568
      %v632 = vpack.c.bf16 %v570, %v570
      %v633 = vpack.c.bf16 %v572, %v572
      %v635 = vsel %vm324, %v630, 0
      %vm637 = vcmask 1043456
      %v639 = vsel %vm637, %v305, 0
      %641 = vmatprep.subr.bf16.mxu0 0
      %642 = vmatpush1.bf16.msra.mxu0 %v639
      %643 = vmatprep.subr.bf16.mxu0 0
      %644 = vmatpush1.bf16.msra.mxu0 0
      %645 = vmatprep.subr.bf16.mxu0 0
      %646 = vmatpush1.bf16.msra.mxu0 0
      %647 = vmatprep.subr.bf16.mxu0 0
      %648 = vmatpush1.bf16.msra.mxu0 0
      %649 = vmatprep.subr.bf16.mxu0 0
      %650 = vmatpush1.bf16.msra.mxu0 0
      %651 = vmatprep.subr.bf16.mxu0 0
      %652 = vmatpush1.bf16.msra.mxu0 0
      %653 = vmatprep.subr.bf16.mxu0 0
      %654 = vmatpush1.bf16.msra.mxu0 0
      %655 = vmatprep.subr.bf16.mxu0 0
      %656 = vmatpush1.bf16.msra.mxu0 0
      %657 = vmatprep.subr.bf16.mxu0 0
      %658 = vmatpush1.bf16.msra.mxu0 0
      %659 = vmatprep.subr.bf16.mxu0 0
      %660 = vmatpush1.bf16.msra.mxu0 0
      %661 = vmatprep.subr.bf16.mxu0 0
      %662 = vmatpush1.bf16.msra.mxu0 0
      %663 = vmatprep.subr.bf16.mxu0 0
      %664 = vmatpush1.bf16.msra.mxu0 0
      %665 = vmatprep.subr.bf16.mxu0 0
      %666 = vmatpush1.bf16.msra.mxu0 0
      %667 = vmatprep.subr.bf16.mxu0 0
      %668 = vmatpush1.bf16.msra.mxu0 0
      %669 = vmatprep.subr.bf16.mxu0 0
      %670 = vmatpush1.bf16.msra.mxu0 0
      %671 = vmatprep.subr.bf16.mxu0 0
      %672 = vmatpush1.bf16.msra.mxu0 0
      %673 = vmatprep.mubr.bf16.mxu0 0
      %674 = vmatmul.mubr.bf16.gmra.mrb[0].mxu0 %v635
      %v675 = vpop.f32.mrb[0].mxu0
      %v676 = vadd.f32 0.0, %v675
      %v677 = vpop.f32.mrb[0].mxu0
      %v678 = vpop.f32.mrb[0].mxu0
      %v679 = vpop.f32.mrb[0].mxu0
      %680 = vdwg.mxu0
      %v682 = vsel %vm324, %v631, 0
      %v685 = vsel %vm637, %v315, 0
      %687 = vmatprep.subr.bf16.mxu0 0
      %688 = vmatpush1.bf16.msra.mxu0 %v685
      %689 = vmatprep.subr.bf16.mxu0 0
      %690 = vmatpush1.bf16.msra.mxu0 0
      %691 = vmatprep.subr.bf16.mxu0 0
      %692 = vmatpush1.bf16.msra.mxu0 0
      %693 = vmatprep.subr.bf16.mxu0 0
      %694 = vmatpush1.bf16.msra.mxu0 0
      %695 = vmatprep.subr.bf16.mxu0 0
      %696 = vmatpush1.bf16.msra.mxu0 0
      %697 = vmatprep.subr.bf16.mxu0 0
      %698 = vmatpush1.bf16.msra.mxu0 0
      %699 = vmatprep.subr.bf16.mxu0 0
      %700 = vmatpush1.bf16.msra.mxu0 0
      %701 = vmatprep.subr.bf16.mxu0 0
      %702 = vmatpush1.bf16.msra.mxu0 0
      %703 = vmatprep.subr.bf16.mxu0 0
      %704 = vmatpush1.bf16.msra.mxu0 0
      %705 = vmatprep.subr.bf16.mxu0 0
      %706 = vmatpush1.bf16.msra.mxu0 0
      %707 = vmatprep.subr.bf16.mxu0 0
      %708 = vmatpush1.bf16.msra.mxu0 0
      %709 = vmatprep.subr.bf16.mxu0 0
      %710 = vmatpush1.bf16.msra.mxu0 0
      %711 = vmatprep.subr.bf16.mxu0 0
      %712 = vmatpush1.bf16.msra.mxu0 0
      %713 = vmatprep.subr.bf16.mxu0 0
      %714 = vmatpush1.bf16.msra.mxu0 0
      %715 = vmatprep.subr.bf16.mxu0 0
      %716 = vmatpush1.bf16.msra.mxu0 0
      %717 = vmatprep.subr.bf16.mxu0 0
      %718 = vmatpush1.bf16.msra.mxu0 0
      %719 = vmatprep.mubr.bf16.mxu0 0
      %720 = vmatmul.mubr.bf16.gmra.mrb[0].mxu0 %v682
      %v721 = vpop.f32.mrb[0].mxu0
      %v722 = vadd.f32 0.0, %v721
      %v723 = vpop.f32.mrb[0].mxu0
      %v724 = vpop.f32.mrb[0].mxu0
      %v725 = vpop.f32.mrb[0].mxu0
      %726 = vdwg.mxu0
      %v728 = vsel %vm324, %v632, 0
      %v731 = vsel %vm637, %v317, 0
      %733 = vmatprep.subr.bf16.mxu0 0
      %734 = vmatpush1.bf16.msra.mxu0 %v731
      %735 = vmatprep.subr.bf16.mxu0 0
      %736 = vmatpush1.bf16.msra.mxu0 0
      %737 = vmatprep.subr.bf16.mxu0 0
      %738 = vmatpush1.bf16.msra.mxu0 0
      %739 = vmatprep.subr.bf16.mxu0 0
      %740 = vmatpush1.bf16.msra.mxu0 0
      %741 = vmatprep.subr.bf16.mxu0 0
      %742 = vmatpush1.bf16.msra.mxu0 0
      %743 = vmatprep.subr.bf16.mxu0 0
      %744 = vmatpush1.bf16.msra.mxu0 0
      %745 = vmatprep.subr.bf16.mxu0 0
      %746 = vmatpush1.bf16.msra.mxu0 0
      %747 = vmatprep.subr.bf16.mxu0 0
      %748 = vmatpush1.bf16.msra.mxu0 0
      %749 = vmatprep.subr.bf16.mxu0 0
      %750 = vmatpush1.bf16.msra.mxu0 0
      %751 = vmatprep.subr.bf16.mxu0 0
      %752 = vmatpush1.bf16.msra.mxu0 0
      %753 = vmatprep.subr.bf16.mxu0 0
      %754 = vmatpush1.bf16.msra.mxu0 0
      %755 = vmatprep.subr.bf16.mxu0 0
      %756 = vmatpush1.bf16.msra.mxu0 0
      %757 = vmatprep.subr.bf16.mxu0 0
      %758 = vmatpush1.bf16.msra.mxu0 0
      %759 = vmatprep.subr.bf16.mxu0 0
      %760 = vmatpush1.bf16.msra.mxu0 0
      %761 = vmatprep.subr.bf16.mxu0 0
      %762 = vmatpush1.bf16.msra.mxu0 0
      %763 = vmatprep.subr.bf16.mxu0 0
      %764 = vmatpush1.bf16.msra.mxu0 0
      %765 = vmatprep.mubr.bf16.mxu0 0
      %766 = vmatmul.mubr.bf16.gmra.mrb[0].mxu0 %v728
      %v767 = vpop.f32.mrb[0].mxu0
      %v768 = vadd.f32 0.0, %v767
      %v769 = vpop.f32.mrb[0].mxu0
      %v770 = vpop.f32.mrb[0].mxu0
      %v771 = vpop.f32.mrb[0].mxu0
      %772 = vdwg.mxu0
      %v774 = vsel %vm324, %v633, 0
      %v777 = vsel %vm637, %v319, 0
      %779 = vmatprep.subr.bf16.mxu0 0
      %780 = vmatpush1.bf16.msra.mxu0 %v777
      %781 = vmatprep.subr.bf16.mxu0 0
      %782 = vmatpush1.bf16.msra.mxu0 0
      %783 = vmatprep.subr.bf16.mxu0 0
      %784 = vmatpush1.bf16.msra.mxu0 0
      %785 = vmatprep.subr.bf16.mxu0 0
      %786 = vmatpush1.bf16.msra.mxu0 0
      %787 = vmatprep.subr.bf16.mxu0 0
      %788 = vmatpush1.bf16.msra.mxu0 0
      %789 = vmatprep.subr.bf16.mxu0 0
      %790 = vmatpush1.bf16.msra.mxu0 0
      %791 = vmatprep.subr.bf16.mxu0 0
      %792 = vmatpush1.bf16.msra.mxu0 0
      %793 = vmatprep.subr.bf16.mxu0 0
      %794 = vmatpush1.bf16.msra.mxu0 0
      %795 = vmatprep.subr.bf16.mxu0 0
      %796 = vmatpush1.bf16.msra.mxu0 0
      %797 = vmatprep.subr.bf16.mxu0 0
      %798 = vmatpush1.bf16.msra.mxu0 0
      %799 = vmatprep.subr.bf16.mxu0 0
      %800 = vmatpush1.bf16.msra.mxu0 0
      %801 = vmatprep.subr.bf16.mxu0 0
      %802 = vmatpush1.bf16.msra.mxu0 0
      %803 = vmatprep.subr.bf16.mxu0 0
      %804 = vmatpush1.bf16.msra.mxu0 0
      %805 = vmatprep.subr.bf16.mxu0 0
      %806 = vmatpush1.bf16.msra.mxu0 0
      %807 = vmatprep.subr.bf16.mxu0 0
      %808 = vmatpush1.bf16.msra.mxu0 0
      %809 = vmatprep.subr.bf16.mxu0 0
      %810 = vmatpush1.bf16.msra.mxu0 0
      %811 = vmatprep.mubr.bf16.mxu0 0
      %812 = vmatmul.mubr.bf16.gmra.mrb[0].mxu0 %v774
      %v813 = vpop.f32.mrb[0].mxu0
      %v814 = vadd.f32 0.0, %v813
      %v815 = vpop.f32.mrb[0].mxu0
      %v816 = vpop.f32.mrb[0].mxu0
      %v817 = vpop.f32.mrb[0].mxu0
      %818 = vdwg.mxu0
      %v819 = vadd.f32 %v626, %v676
      %v820 = vadd.f32 %v627, %v722
      %v821 = vadd.f32 %v628, %v768
      %v822 = vadd.f32 %v629, %v814
      %823 = vst.msk [vmem:[#allocation5] sm:$0xff] %vm324, %v819
      %824 = vst.msk [vmem:[#allocation5 + $0x8] sm:$0xff] %vm324, %v820
      %825 = vst.msk [vmem:[#allocation5 + $0x10] sm:$0xff] %vm324, %v821
      %826 = vst.msk [vmem:[#allocation5 + $0x18] sm:$0xff] %vm324, %v822
      %827 = vst.msk [vmem:[#allocation3] sm:$0xff] %vm597, %v525
      %828 = vst.msk [vmem:[#allocation3 + $0x8] sm:$0xff] %vm597, %v526
      %829 = vst.msk [vmem:[#allocation3 + $0x10] sm:$0xff] %vm597, %v527
      %830 = vst.msk [vmem:[#allocation3 + $0x18] sm:$0xff] %vm597, %v528
      // Predicated region
      $region37: #{multi_head_attention.4} parent=31 // pred_check
        %p831 = pneg %p267
      $region38: #{multi_head_attention.4} parent=31 // pred_check_branch
        %833 = sbr.rel (%p831) target = $region40
      $region39: #{multi_head_attention.4} parent=31 // pred_region
        %v834 = vld [vmem:[#allocation4] sm:$0xff]
        %v835 = vld [vmem:[#allocation4 + $0x8] sm:$0xff]
        %v836 = vld [vmem:[#allocation4 + $0x10] sm:$0xff]
        %v837 = vld [vmem:[#allocation4 + $0x18] sm:$0xff]
        %v838 = vrcp.pop %v834
        %v839 = vrcp.pop %v835
        %v840 = vrcp.pop %v836
        %v841 = vrcp.pop %v837
        %v842 = vld [vmem:[#allocation5] sm:$0xff]
        %v843 = vld [vmem:[#allocation5 + $0x8] sm:$0xff]
        %v844 = vld [vmem:[#allocation5 + $0x10] sm:$0xff]
        %v845 = vld [vmem:[#allocation5 + $0x18] sm:$0xff]
        %847 = vset.pattern.permute.xlu0 0
        %848 = vperm.xlu0 %847, %v838
        %v849 = vpop.permute.xlu0 %848
        %852 = vset.pattern.permute.xlu0 0
        %853 = vperm.xlu0 %852, %v839
        %v854 = vpop.permute.xlu0 %853
        %857 = vset.pattern.permute.xlu0 0
        %858 = vperm.xlu0 %857, %v840
        %v859 = vpop.permute.xlu0 %858
        %862 = vset.pattern.permute.xlu0 0
        %863 = vperm.xlu0 %862, %v841
        %v864 = vpop.permute.xlu0 %863
        %v866 = vmul.f32 %v842, %v849
        %v867 = vmul.f32 %v843, %v854
        %v868 = vmul.f32 %v844, %v859
        %v869 = vmul.f32 %v845, %v864
        %871 = vrot.lane.b32.xlu0 %v867, 8
        %v872 = vpop.permute.xlu0 %871
        %875 = vrot.lane.b32.xlu0 %v868, 16
        %v876 = vpop.permute.xlu0 %875
        %879 = vrot.lane.b32.xlu0 %v869, 24
        %v880 = vpop.permute.xlu0 %879
        %v882 = vsel %vm324, %v866, %v872
        %vm883 = vcmask 130048
        %v884 = vsel %vm883, %v882, %v876
        %vm885 = vcmask 195584
        %v886 = vsel %vm885, %v884, %v880
        %v887 = vpack.c.bf16 %v886, %v886
        %vm888 = vcmask 257024
        %889 = vst.msk [vmem:[%s265] sm:$0xf] %vm888, %v887
      $region40: #{multi_head_attention.4} parent=31 // pred_fallthru
        _
      %p890 = scmp.lt.s32.totalorder %s19, 1
      %s891 = scalar_select %p890, %s19, 1
      %p892 = scmp.lt.s32.totalorder %s20, 0
      %s893 = scalar_select %p892, %s20, 0
      %s894 = sadd.s32 %s893, %s891
      %s895 = smul.addr %s894, 4
      %s896 = scalar_lea.vmem %s3, %s895
      // Predicated region
      $region41: #{multi_head_attention.4} parent=31 // pred_check
        %p897 = pneg %p137
      $region42: #{multi_head_attention.4} parent=31 // pred_check_branch
        %899 = sbr.rel (%p897) target = $region44
      $region43: #{multi_head_attention.4} parent=31 // pred_region
        _
      $region44: #{multi_head_attention.4} parent=31 // pred_fallthru
        _
    $region32: #{multi_head_attention.4} parent=5 // pred_fallthru
      _
    %p900 = scmp.le.s32.totalorder 2, %s9
    // Predicated region
    $region45: #{multi_head_attention.4} parent=5 // pred_check
      %p901 = pneg %p900
    $region46: #{multi_head_attention.4} parent=5 // pred_check_branch
      %903 = sbr.rel (%p901) target = $region48
    $region47: #{multi_head_attention.4} parent=5 // pred_region
      %s904 = ssub.s32 %s9, 2
      // Predicated region
      $region49: #{multi_head_attention.4} parent=47 // pred_check
        %p905 = pneg %p143
      $region50: #{multi_head_attention.4} parent=47 // pred_check_branch
        %907 = sbr.rel (%p905) target = $region52
      $region51: #{multi_head_attention.4} parent=47 // pred_region
        %p908 = scmp.lt.s32.totalorder %s22, 1
        %s909 = scalar_select %p908, %s22, 1
        %p910 = scmp.lt.s32.totalorder %s23, 0
        %s911 = scalar_select %p910, %s23, 0
        %s912 = sadd.s32 %s911, %s909
        %s913 = smul.addr %s912, 4
        %s914 = scalar_lea.vmem %s3, %s913
      $region52: #{multi_head_attention.4} parent=47 // pred_fallthru
        _
    $region48: #{multi_head_attention.4} parent=5 // pred_fallthru
      _
  $region6: #{multi_head_attention.4} parent=0 // loop_footer
    %s13 = sadd.s32 1, %s9
  $region7: #{multi_head_attention.4} parent=0 // loop_footer_branch
    %8 = sbr.rel target = $region3
  $region8: #{multi_head_attention.4} parent=0 // loop_exit
    _

</llo_original>
